<compile_context>
chip_gen: v7x
topology: tpu7x:2x2x1
jax: 0.10.0
libtpu: 0.0.40
codegen_flags: <defaults>
</compile_context>

<pallas_src>
import functools

import jax
import jax.numpy as jnp
import numpy as np
from jax.experimental import pallas as pl
from jax.experimental.pallas import tpu as pltpu


def _round_up(x, m):
    return ((x + m - 1) // m) * m


def _vmem_limit_bytes():
    # Generation-aware scoped-VMEM limit: ~75% of physical VMEM, capped at 100 MiB
    # (v5e/v6e have 128 MiB, v7x only 64 MiB). Falls back to a v7x-safe 48 MiB.
    try:
        cap = pltpu.get_tpu_info().vmem_capacity_bytes
        return int(min(0.75 * cap, 100 * 1024 * 1024))
    except Exception:
        return 48 * 1024 * 1024


def _gru_kernel(xp_ref,    # (Tc, Bb, 3*Hp)  pre-projected inputs for this time chunk
                wh_ref,    # (Hp, 3*Hp)      fused recurrent weights [r|z|n] (single-buffered)
                bhn_ref,   # (1, Hp)         hidden bias of the n-gate (stays inside r*(...))
                out_ref,   # (Bb, Hp) f32    resident hidden-state accumulator == output
                *, seq_len, chunk, hp):
    c = pl.program_id(1)                               # time-chunk index (serial axis)

    @pl.when(c == 0)
    def _():
        out_ref[...] = jnp.zeros_like(out_ref)

    bb = out_ref.shape[0]
    # Hoisted once per chunk (NOT once per unrolled step).
    bhn_b = jnp.broadcast_to(bhn_ref[...].astype(jnp.float32), (bb, hp))

    def step(i, h):
        # Pre-activations from the input projection (input biases already folded in).
        xp_t = xp_ref[i].astype(jnp.float32)           # (Bb, 3*Hp)
        # Single fused recurrent matmul: (Bb, Hp) @ (Hp, 3*Hp), f32 accumulation.
        hh = jnp.dot(h.astype(wh_ref.dtype), wh_ref[...],
                     preferred_element_type=jnp.float32)
        xr = xp_t[:, 0:hp]
        xz = xp_t[:, hp:2 * hp]
        xn = xp_t[:, 2 * hp:3 * hp]
        hr = hh[:, 0:hp]
        hz = hh[:, hp:2 * hp]
        hn = hh[:, 2 * hp:3 * hp]

        # PyTorch GRU equations (gate order r, z, n); all gate math in f32.
        r = jax.nn.sigmoid(xr + hr)
        z = jax.nn.sigmoid(xz + hz)
        n = jnp.tanh(xn + r * (hn + bhn_b))
        h_new = (1.0 - z) * n + z * h

        if seq_len % chunk == 0:
            return h_new
        t = c * chunk + i                              # mask padded tail time steps
        return jnp.where(t < seq_len, h_new, h)

    unroll = chunk if chunk <= 8 else 8                # partial unroll: no vreg spills
    out_ref[...] = jax.lax.fori_loop(0, chunk, step, out_ref[...], unroll=unroll)


def gru_forward(x, packed, *, compute_dtype=jnp.bfloat16, time_chunk=32):
    """x: (B, T, I) float32.  Returns final hidden state (B, H) float32."""
    B, T, I = x.shape
    H = packed["hidden_size"]
    Hp = packed["wh_cat"].shape[0]
    G = 3 * Hp

    # Batch padding; allow a 2-way "parallel" batch split (v7x dual TC) when big enough.
    Bp = _round_up(max(B, 1), 8)
    if Bp >= 16:
        Bp = _round_up(Bp, 16)
        batch_block = Bp // 2
    else:
        batch_block = Bp
    num_batch_blocks = Bp // batch_block

    Tc = min(time_chunk, T)
    num_chunks = pl.cdiv(T, Tc)
    T_pad = num_chunks * Tc

    # ---- Hoisted input projection, produced directly in time-major layout ----
    # Transpose the *narrow* x (I columns), not the wide 3Hp projection: no extra HBM
    # pass over the (T_pad, Bp, 3Hp) tensor.
    x_tm = jnp.transpose(x, (1, 0, 2))                               # (T, B, I)
    x_tm = jnp.pad(x_tm, ((0, T_pad - T), (0, Bp - B), (0, 0)))      # (T_pad, Bp, I)
    wx = packed["wx_cat"].astype(compute_dtype)                      # (I, 3*Hp)
    xp = jnp.dot(x_tm.reshape(T_pad * Bp, I).astype(compute_dtype), wx,
                 preferred_element_type=jnp.float32)
    xp = xp + packed["bx_cat"][None, :]                              # fold b_r/b_z/b_in
    xp = xp.reshape(T_pad, Bp, G).astype(compute_dtype)              # already time-major

    wh = packed["wh_cat"].astype(compute_dtype)                      # (Hp, 3*Hp)
    b_hn = packed["b_hn"].astype(jnp.float32)                        # (1, Hp)

    kernel = functools.partial(_gru_kernel, seq_len=T, chunk=Tc, hp=Hp)

    grid_spec = pltpu.PrefetchScalarGridSpec(
        num_scalar_prefetch=0,
        grid=(num_batch_blocks, num_chunks),                         # time axis last
        in_specs=[
            # time-chunk of x-projections for this batch block
            pl.BlockSpec((Tc, batch_block, G), lambda b, c: (c, b, 0)),
            # grid-invariant weights / bias: single-buffered (no pointless double VMEM)
            pl.BlockSpec((Hp, G), lambda b, c: (0, 0),
                         pipeline_mode=pl.Buffered(1)),
            pl.BlockSpec((1, Hp), lambda b, c: (0, 0),
                         pipeline_mode=pl.Buffered(1)),
        ],
        out_specs=pl.BlockSpec((batch_block, Hp), lambda b, c: (b, 0)),  # resident acc
    )

    out = pl.pallas_call(
        kernel,
        out_shape=jax.ShapeDtypeStruct((Bp, Hp), jnp.float32),
        grid_spec=grid_spec,
        compiler_params=pltpu.CompilerParams(
            dimension_semantics=("parallel", "arbitrary"),           # batch ∥, time serial
            vmem_limit_bytes=_vmem_limit_bytes(),
        ),
    )(xp, wh, b_hn)

    return out[:B, :H]


def init_gru_params(key, input_size, hidden_size):
    """Raw PyTorch-layout nn.GRU params: U(-1/sqrt(H), 1/sqrt(H)), gate order [r, z, n]."""
    k = 1.0 / np.sqrt(hidden_size)
    keys = jax.random.split(key, 4)
    return {
        "w_ih": jax.random.uniform(keys[0], (3 * hidden_size, input_size), jnp.float32, -k, k),
        "w_hh": jax.random.uniform(keys[1], (3 * hidden_size, hidden_size), jnp.float32, -k, k),
        "b_ih": jax.random.uniform(keys[2], (3 * hidden_size,), jnp.float32, -k, k),
        "b_hh": jax.random.uniform(keys[3], (3 * hidden_size,), jnp.float32, -k, k),
    }


def pack_gru_params(raw, *, lane=128):
    """Pack PyTorch-layout weights into fused, lane-padded kernel operands.

    NOTE: the zero-ness of every padded row/column/bias lane is load-bearing. With zero
    pads the padded hidden lanes evolve as r = z = 0.5, n = 0, so h stays exactly 0 in
    those lanes and never leaks into real lanes through the fused recurrent matmul.
    jnp.pad guarantees this; keep it true if the packing ever changes.
    """
    # TODO(synk): for H < 128, pack the three gates contiguously (pad 3H -> next multiple
    # of 128) instead of per-gate lane padding; cuts recurrent matmul width and weight /
    # x-proj traffic ~3-4x at small H, at the cost of non-128-aligned in-kernel gate slices.
    w_ih, w_hh, b_ih, b_hh = raw["w_ih"], raw["w_hh"], raw["b_ih"], raw["b_hh"]
    H = w_hh.shape[1]
    Hp = _round_up(H, lane)

    gi = jnp.split(w_ih, 3, axis=0)    # each (H, I)
    gh = jnp.split(w_hh, 3, axis=0)    # each (H, H)
    bi = jnp.split(b_ih, 3)
    bh = jnp.split(b_hh, 3)

    pad_cols = lambda w: jnp.pad(w, ((0, 0), (0, Hp - H)))   # pad gate output dim to Hp
    pad_vec = lambda b: jnp.pad(b, (0, Hp - H))

    wx_cat = jnp.concatenate([pad_cols(g.T) for g in gi], axis=1)          # (I, 3*Hp)
    wh_cat = jnp.concatenate([pad_cols(g.T) for g in gh], axis=1)          # (H, 3*Hp)
    wh_cat = jnp.pad(wh_cat, ((0, Hp - H), (0, 0)))                        # (Hp, 3*Hp)

    # b_ir+b_hr and b_iz+b_hz fuse fully; b_in folds into x-proj; b_hn stays separate.
    bx_cat = jnp.concatenate([pad_vec(bi[0] + bh[0]),
                              pad_vec(bi[1] + bh[1]),
                              pad_vec(bi[2])])                             # (3*Hp,)
    b_hn = pad_vec(bh[2]).reshape(1, Hp)

    return {"wx_cat": wx_cat, "wh_cat": wh_cat, "bx_cat": bx_cat,
            "b_hn": b_hn, "hidden_size": H}


def gru_reference(x, raw):
    """Pure-JAX lax.scan reference using the raw PyTorch-layout weights."""
    H = raw["w_hh"].shape[1]
    w_ir, w_iz, w_in = jnp.split(raw["w_ih"], 3, axis=0)
    w_hr, w_hz, w_hn = jnp.split(raw["w_hh"], 3, axis=0)
    b_ir, b_iz, b_in = jnp.split(raw["b_ih"], 3)
    b_hr, b_hz, b_hn = jnp.split(raw["b_hh"], 3)

    def step(h, x_t):
        r = jax.nn.sigmoid(x_t @ w_ir.T + b_ir + h @ w_hr.T + b_hr)
        z = jax.nn.sigmoid(x_t @ w_iz.T + b_iz + h @ w_hz.T + b_hz)
        n = jnp.tanh(x_t @ w_in.T + b_in + r * (h @ w_hn.T + b_hn))
        return (1.0 - z) * n + z * h, None

    h0 = jnp.zeros((x.shape[0], H), jnp.float32)
    h_final, _ = jax.lax.scan(step, h0, jnp.transpose(x, (1, 0, 2)))
    return h_final


if __name__ == "__main__":
    B, T, I, H = 2, 8, 16, 32

    key = jax.random.PRNGKey(0)
    k_x, k_p = jax.random.split(key)
    x = jax.random.normal(k_x, (B, T, I), jnp.float32)

    raw = init_gru_params(k_p, I, H)
    packed = pack_gru_params(raw)

    ref = jax.block_until_ready(gru_reference(x, raw))

    # f32 MXU operands: strict check (also the long-sequence-safe fallback path).
    out_f32 = jax.block_until_ready(gru_forward(x, packed, compute_dtype=jnp.float32))
    assert out_f32.shape == (B, H)
    np.testing.assert_allclose(np.asarray(out_f32), np.asarray(ref), rtol=1e-4, atol=1e-4)

    # Default path: bf16 MXU operands (wh_cat + xp stream), f32 carry & gate math.
    # NOTE: bf16 error compounds with T; validated here at T=8 — use compute_dtype=f32
    # for very long sequences if tighter accuracy is required.
    out_bf16 = jax.block_until_ready(gru_forward(x, packed))
    assert out_bf16.shape == (B, H)
    np.testing.assert_allclose(np.asarray(out_bf16), np.asarray(ref), rtol=5e-2, atol=5e-2)

    print("KERNEL_OK")
</pallas_src>

<mosaic_0001>
module attributes {stable_mosaic.version = 11 : i64} {
  func.func @_gru_kernel(%arg0: i32, %arg1: i32, %arg2: memref<8x8x384xf32, #tpu.memory_space<vmem>>, %arg3: memref<128x384xf32, #tpu.memory_space<vmem>>, %arg4: memref<1x128xf32, #tpu.memory_space<vmem>>, %arg5: memref<8x128xf32, #tpu.memory_space<vmem>>) attributes {dimension_semantics = [#tpu.dimension_semantics<parallel>, #tpu.dimension_semantics<arbitrary>], iteration_bounds = array<i64: 1, 1>, scalar_prefetch = 0 : i64, scratch_operands = 0 : i64, tpu.core_type = #tpu.core_type<tc>, window_params = [{transform_indices = @transform_0, window_bounds = array<i64: 8, 8, 384>}, {pipeline_mode = #tpu.pipeline_mode<synchronous>, transform_indices = @transform_1, window_bounds = array<i64: 128, 384>}, {pipeline_mode = #tpu.pipeline_mode<synchronous>, transform_indices = @transform_2, window_bounds = array<i64: 1, 128>}, {transform_indices = @transform_3, window_bounds = array<i64: 8, 128>}]} {
    %c0_i32 = arith.constant 0 : i32
    %0 = arith.cmpi eq, %arg1, %c0_i32 : i32
    %1 = arith.extui %0 : i1 to i32
    %c0_i32_0 = arith.constant 0 : i32
    %2 = arith.cmpi ne, %1, %c0_i32_0 : i32
    scf.if %2 {
      %cst_70 = arith.constant 0.000000e+00 : f32
      %264 = vector.broadcast %cst_70 : f32 to vector<8x128xf32>
      %c0_71 = arith.constant 0 : index
      %c0_72 = arith.constant 0 : index
      %265 = vector.load %arg5[%c0_71, %c0_72] : memref<8x128xf32, #tpu.memory_space<vmem>>, vector<8x128xf32>
      tpu.vector_store %arg5[%c0_71, %c0_72], %264 {strides = array<i32>} : memref<8x128xf32, #tpu.memory_space<vmem>>, vector<8x128xf32>,
    } else {
    }
    %c0 = arith.constant 0 : index
    %c0_1 = arith.constant 0 : index
    %3 = vector.load %arg4[%c0, %c0_1] : memref<1x128xf32, #tpu.memory_space<vmem>>, vector<1x128xf32>
    %4 = vector.shape_cast %3 : vector<1x128xf32> to vector<1x128xf32>
    %5 = vector.broadcast %4 : vector<1x128xf32> to vector<8x128xf32>
    %c0_2 = arith.constant 0 : index
    %c0_3 = arith.constant 0 : index
    %6 = vector.load %arg5[%c0_2, %c0_3] : memref<8x128xf32, #tpu.memory_space<vmem>>, vector<8x128xf32>
    %c0_i32_4 = arith.constant 0 : i32
    %7 = arith.index_cast %c0_i32_4 : i32 to index
    %c0_5 = arith.constant 0 : index
    %c0_6 = arith.constant 0 : index
    %8 = vector.load %arg2[%7, %c0_5, %c0_6] : memref<8x8x384xf32, #tpu.memory_space<vmem>>, vector<1x8x384xf32>
    %9 = vector.shape_cast %8 : vector<1x8x384xf32> to vector<8x384xf32>
    %c0_7 = arith.constant 0 : index
    %c0_8 = arith.constant 0 : index
    %10 = vector.load %arg3[%c0_7, %c0_8] : memref<128x384xf32, #tpu.memory_space<vmem>>, vector<128x384xf32>
    %cst = arith.constant dense<0.000000e+00> : vector<8x384xf32>
    %11 = tpu.matmul %6, %10, %cst {dimension_numbers = #tpu.dot_dimension_numbers<[1], [0], [0], [1], [0, 0, 1, 1], [], []>} : vector<8x128xf32>, vector<128x384xf32>, vector<8x384xf32> -> vector<8x384xf32>
    %12 = vector.extract_strided_slice %9 {offsets = [0, 0], sizes = [8, 128], strides = [1, 1]} : vector<8x384xf32> to vector<8x128xf32>
    %13 = vector.extract_strided_slice %9 {offsets = [0, 128], sizes = [8, 128], strides = [1, 1]} : vector<8x384xf32> to vector<8x128xf32>
    %14 = vector.extract_strided_slice %9 {offsets = [0, 256], sizes = [8, 128], strides = [1, 1]} : vector<8x384xf32> to vector<8x128xf32>
    %15 = vector.extract_strided_slice %11 {offsets = [0, 0], sizes = [8, 128], strides = [1, 1]} : vector<8x384xf32> to vector<8x128xf32>
    %16 = vector.extract_strided_slice %11 {offsets = [0, 128], sizes = [8, 128], strides = [1, 1]} : vector<8x384xf32> to vector<8x128xf32>
    %17 = vector.extract_strided_slice %11 {offsets = [0, 256], sizes = [8, 128], strides = [1, 1]} : vector<8x384xf32> to vector<8x128xf32>
    %18 = arith.addf %12, %15 : vector<8x128xf32>
    %19 = arith.negf %18 : vector<8x128xf32>
    %20 = math.exp %19 : vector<8x128xf32>
    %cst_9 = arith.constant 1.000000e+00 : f32
    %21 = vector.broadcast %cst_9 : f32 to vector<8x128xf32>
    %22 = arith.addf %21, %20 : vector<8x128xf32>
    %23 = arith.divf %21, %22 : vector<8x128xf32>
    %24 = arith.addf %13, %16 : vector<8x128xf32>
    %25 = arith.negf %24 : vector<8x128xf32>
    %26 = math.exp %25 : vector<8x128xf32>
    %cst_10 = arith.constant 1.000000e+00 : f32
    %27 = vector.broadcast %cst_10 : f32 to vector<8x128xf32>
    %28 = arith.addf %27, %26 : vector<8x128xf32>
    %29 = arith.divf %27, %28 : vector<8x128xf32>
    %30 = arith.addf %17, %5 : vector<8x128xf32>
    %31 = arith.mulf %23, %30 : vector<8x128xf32>
    %32 = arith.addf %14, %31 : vector<8x128xf32>
    %33 = math.tanh %32 : vector<8x128xf32>
    %cst_11 = arith.constant 1.000000e+00 : f32
    %34 = vector.broadcast %cst_11 : f32 to vector<8x128xf32>
    %35 = arith.subf %34, %29 : vector<8x128xf32>
    %36 = arith.mulf %35, %33 : vector<8x128xf32>
    %37 = arith.mulf %29, %6 : vector<8x128xf32>
    %38 = arith.addf %36, %37 : vector<8x128xf32>
    %c1_i32 = arith.constant 1 : i32
    %39 = arith.index_cast %c1_i32 : i32 to index
    %c0_12 = arith.constant 0 : index
    %c0_13 = arith.constant 0 : index
    %40 = vector.load %arg2[%39, %c0_12, %c0_13] : memref<8x8x384xf32, #tpu.memory_space<vmem>>, vector<1x8x384xf32>
    %41 = vector.shape_cast %40 : vector<1x8x384xf32> to vector<8x384xf32>
    %c0_14 = arith.constant 0 : index
    %c0_15 = arith.constant 0 : index
    %42 = vector.load %arg3[%c0_14, %c0_15] : memref<128x384xf32, #tpu.memory_space<vmem>>, vector<128x384xf32>
    %cst_16 = arith.constant dense<0.000000e+00> : vector<8x384xf32>
    %43 = tpu.matmul %38, %42, %cst_16 {dimension_numbers = #tpu.dot_dimension_numbers<[1], [0], [0], [1], [0, 0, 1, 1], [], []>} : vector<8x128xf32>, vector<128x384xf32>, vector<8x384xf32> -> vector<8x384xf32>
    %44 = vector.extract_strided_slice %41 {offsets = [0, 0], sizes = [8, 128], strides = [1, 1]} : vector<8x384xf32> to vector<8x128xf32>
    %45 = vector.extract_strided_slice %41 {offsets = [0, 128], sizes = [8, 128], strides = [1, 1]} : vector<8x384xf32> to vector<8x128xf32>
    %46 = vector.extract_strided_slice %41 {offsets = [0, 256], sizes = [8, 128], strides = [1, 1]} : vector<8x384xf32> to vector<8x128xf32>
    %47 = vector.extract_strided_slice %43 {offsets = [0, 0], sizes = [8, 128], strides = [1, 1]} : vector<8x384xf32> to vector<8x128xf32>
    %48 = vector.extract_strided_slice %43 {offsets = [0, 128], sizes = [8, 128], strides = [1, 1]} : vector<8x384xf32> to vector<8x128xf32>
    %49 = vector.extract_strided_slice %43 {offsets = [0, 256], sizes = [8, 128], strides = [1, 1]} : vector<8x384xf32> to vector<8x128xf32>
    %50 = arith.addf %44, %47 : vector<8x128xf32>
    %51 = arith.negf %50 : vector<8x128xf32>
    %52 = math.exp %51 : vector<8x128xf32>
    %cst_17 = arith.constant 1.000000e+00 : f32
    %53 = vector.broadcast %cst_17 : f32 to vector<8x128xf32>
    %54 = arith.addf %53, %52 : vector<8x128xf32>
    %55 = arith.divf %53, %54 : vector<8x128xf32>
    %56 = arith.addf %45, %48 : vector<8x128xf32>
    %57 = arith.negf %56 : vector<8x128xf32>
    %58 = math.exp %57 : vector<8x128xf32>
    %cst_18 = arith.constant 1.000000e+00 : f32
    %59 = vector.broadcast %cst_18 : f32 to vector<8x128xf32>
    %60 = arith.addf %59, %58 : vector<8x128xf32>
    %61 = arith.divf %59, %60 : vector<8x128xf32>
    %62 = arith.addf %49, %5 : vector<8x128xf32>
    %63 = arith.mulf %55, %62 : vector<8x128xf32>
    %64 = arith.addf %46, %63 : vector<8x128xf32>
    %65 = math.tanh %64 : vector<8x128xf32>
    %cst_19 = arith.constant 1.000000e+00 : f32
    %66 = vector.broadcast %cst_19 : f32 to vector<8x128xf32>
    %67 = arith.subf %66, %61 : vector<8x128xf32>
    %68 = arith.mulf %67, %65 : vector<8x128xf32>
    %69 = arith.mulf %61, %38 : vector<8x128xf32>
    %70 = arith.addf %68, %69 : vector<8x128xf32>
    %c2_i32 = arith.constant 2 : i32
    %71 = arith.index_cast %c2_i32 : i32 to index
    %c0_20 = arith.constant 0 : index
    %c0_21 = arith.constant 0 : index
    %72 = vector.load %arg2[%71, %c0_20, %c0_21] : memref<8x8x384xf32, #tpu.memory_space<vmem>>, vector<1x8x384xf32>
    %73 = vector.shape_cast %72 : vector<1x8x384xf32> to vector<8x384xf32>
    %c0_22 = arith.constant 0 : index
    %c0_23 = arith.constant 0 : index
    %74 = vector.load %arg3[%c0_22, %c0_23] : memref<128x384xf32, #tpu.memory_space<vmem>>, vector<128x384xf32>
    %cst_24 = arith.constant dense<0.000000e+00> : vector<8x384xf32>
    %75 = tpu.matmul %70, %74, %cst_24 {dimension_numbers = #tpu.dot_dimension_numbers<[1], [0], [0], [1], [0, 0, 1, 1], [], []>} : vector<8x128xf32>, vector<128x384xf32>, vector<8x384xf32> -> vector<8x384xf32>
    %76 = vector.extract_strided_slice %73 {offsets = [0, 0], sizes = [8, 128], strides = [1, 1]} : vector<8x384xf32> to vector<8x128xf32>
    %77 = vector.extract_strided_slice %73 {offsets = [0, 128], sizes = [8, 128], strides = [1, 1]} : vector<8x384xf32> to vector<8x128xf32>
    %78 = vector.extract_strided_slice %73 {offsets = [0, 256], sizes = [8, 128], strides = [1, 1]} : vector<8x384xf32> to vector<8x128xf32>
    %79 = vector.extract_strided_slice %75 {offsets = [0, 0], sizes = [8, 128], strides = [1, 1]} : vector<8x384xf32> to vector<8x128xf32>
    %80 = vector.extract_strided_slice %75 {offsets = [0, 128], sizes = [8, 128], strides = [1, 1]} : vector<8x384xf32> to vector<8x128xf32>
    %81 = vector.extract_strided_slice %75 {offsets = [0, 256], sizes = [8, 128], strides = [1, 1]} : vector<8x384xf32> to vector<8x128xf32>
    %82 = arith.addf %76, %79 : vector<8x128xf32>
    %83 = arith.negf %82 : vector<8x128xf32>
    %84 = math.exp %83 : vector<8x128xf32>
    %cst_25 = arith.constant 1.000000e+00 : f32
    %85 = vector.broadcast %cst_25 : f32 to vector<8x128xf32>
    %86 = arith.addf %85, %84 : vector<8x128xf32>
    %87 = arith.divf %85, %86 : vector<8x128xf32>
    %88 = arith.addf %77, %80 : vector<8x128xf32>
    %89 = arith.negf %88 : vector<8x128xf32>
    %90 = math.exp %89 : vector<8x128xf32>
    %cst_26 = arith.constant 1.000000e+00 : f32
    %91 = vector.broadcast %cst_26 : f32 to vector<8x128xf32>
    %92 = arith.addf %91, %90 : vector<8x128xf32>
    %93 = arith.divf %91, %92 : vector<8x128xf32>
    %94 = arith.addf %81, %5 : vector<8x128xf32>
    %95 = arith.mulf %87, %94 : vector<8x128xf32>
    %96 = arith.addf %78, %95 : vector<8x128xf32>
    %97 = math.tanh %96 : vector<8x128xf32>
    %cst_27 = arith.constant 1.000000e+00 : f32
    %98 = vector.broadcast %cst_27 : f32 to vector<8x128xf32>
    %99 = arith.subf %98, %93 : vector<8x128xf32>
    %100 = arith.mulf %99, %97 : vector<8x128xf32>
    %101 = arith.mulf %93, %70 : vector<8x128xf32>
    %102 = arith.addf %100, %101 : vector<8x128xf32>
    %c3_i32 = arith.constant 3 : i32
    %103 = arith.index_cast %c3_i32 : i32 to index
    %c0_28 = arith.constant 0 : index
    %c0_29 = arith.constant 0 : index
    %104 = vector.load %arg2[%103, %c0_28, %c0_29] : memref<8x8x384xf32, #tpu.memory_space<vmem>>, vector<1x8x384xf32>
    %105 = vector.shape_cast %104 : vector<1x8x384xf32> to vector<8x384xf32>
    %c0_30 = arith.constant 0 : index
    %c0_31 = arith.constant 0 : index
    %106 = vector.load %arg3[%c0_30, %c0_31] : memref<128x384xf32, #tpu.memory_space<vmem>>, vector<128x384xf32>
    %cst_32 = arith.constant dense<0.000000e+00> : vector<8x384xf32>
    %107 = tpu.matmul %102, %106, %cst_32 {dimension_numbers = #tpu.dot_dimension_numbers<[1], [0], [0], [1], [0, 0, 1, 1], [], []>} : vector<8x128xf32>, vector<128x384xf32>, vector<8x384xf32> -> vector<8x384xf32>
    %108 = vector.extract_strided_slice %105 {offsets = [0, 0], sizes = [8, 128], strides = [1, 1]} : vector<8x384xf32> to vector<8x128xf32>
    %109 = vector.extract_strided_slice %105 {offsets = [0, 128], sizes = [8, 128], strides = [1, 1]} : vector<8x384xf32> to vector<8x128xf32>
    %110 = vector.extract_strided_slice %105 {offsets = [0, 256], sizes = [8, 128], strides = [1, 1]} : vector<8x384xf32> to vector<8x128xf32>
    %111 = vector.extract_strided_slice %107 {offsets = [0, 0], sizes = [8, 128], strides = [1, 1]} : vector<8x384xf32> to vector<8x128xf32>
    %112 = vector.extract_strided_slice %107 {offsets = [0, 128], sizes = [8, 128], strides = [1, 1]} : vector<8x384xf32> to vector<8x128xf32>
    %113 = vector.extract_strided_slice %107 {offsets = [0, 256], sizes = [8, 128], strides = [1, 1]} : vector<8x384xf32> to vector<8x128xf32>
    %114 = arith.addf %108, %111 : vector<8x128xf32>
    %115 = arith.negf %114 : vector<8x128xf32>
    %116 = math.exp %115 : vector<8x128xf32>
    %cst_33 = arith.constant 1.000000e+00 : f32
    %117 = vector.broadcast %cst_33 : f32 to vector<8x128xf32>
    %118 = arith.addf %117, %116 : vector<8x128xf32>
    %119 = arith.divf %117, %118 : vector<8x128xf32>
    %120 = arith.addf %109, %112 : vector<8x128xf32>
    %121 = arith.negf %120 : vector<8x128xf32>
    %122 = math.exp %121 : vector<8x128xf32>
    %cst_34 = arith.constant 1.000000e+00 : f32
    %123 = vector.broadcast %cst_34 : f32 to vector<8x128xf32>
    %124 = arith.addf %123, %122 : vector<8x128xf32>
    %125 = arith.divf %123, %124 : vector<8x128xf32>
    %126 = arith.addf %113, %5 : vector<8x128xf32>
    %127 = arith.mulf %119, %126 : vector<8x128xf32>
    %128 = arith.addf %110, %127 : vector<8x128xf32>
    %129 = math.tanh %128 : vector<8x128xf32>
    %cst_35 = arith.constant 1.000000e+00 : f32
    %130 = vector.broadcast %cst_35 : f32 to vector<8x128xf32>
    %131 = arith.subf %130, %125 : vector<8x128xf32>
    %132 = arith.mulf %131, %129 : vector<8x128xf32>
    %133 = arith.mulf %125, %102 : vector<8x128xf32>
    %134 = arith.addf %132, %133 : vector<8x128xf32>
    %c4_i32 = arith.constant 4 : i32
    %135 = arith.index_cast %c4_i32 : i32 to index
    %c0_36 = arith.constant 0 : index
    %c0_37 = arith.constant 0 : index
    %136 = vector.load %arg2[%135, %c0_36, %c0_37] : memref<8x8x384xf32, #tpu.memory_space<vmem>>, vector<1x8x384xf32>
    %137 = vector.shape_cast %136 : vector<1x8x384xf32> to vector<8x384xf32>
    %c0_38 = arith.constant 0 : index
    %c0_39 = arith.constant 0 : index
    %138 = vector.load %arg3[%c0_38, %c0_39] : memref<128x384xf32, #tpu.memory_space<vmem>>, vector<128x384xf32>
    %cst_40 = arith.constant dense<0.000000e+00> : vector<8x384xf32>
    %139 = tpu.matmul %134, %138, %cst_40 {dimension_numbers = #tpu.dot_dimension_numbers<[1], [0], [0], [1], [0, 0, 1, 1], [], []>} : vector<8x128xf32>, vector<128x384xf32>, vector<8x384xf32> -> vector<8x384xf32>
    %140 = vector.extract_strided_slice %137 {offsets = [0, 0], sizes = [8, 128], strides = [1, 1]} : vector<8x384xf32> to vector<8x128xf32>
    %141 = vector.extract_strided_slice %137 {offsets = [0, 128], sizes = [8, 128], strides = [1, 1]} : vector<8x384xf32> to vector<8x128xf32>
    %142 = vector.extract_strided_slice %137 {offsets = [0, 256], sizes = [8, 128], strides = [1, 1]} : vector<8x384xf32> to vector<8x128xf32>
    %143 = vector.extract_strided_slice %139 {offsets = [0, 0], sizes = [8, 128], strides = [1, 1]} : vector<8x384xf32> to vector<8x128xf32>
    %144 = vector.extract_strided_slice %139 {offsets = [0, 128], sizes = [8, 128], strides = [1, 1]} : vector<8x384xf32> to vector<8x128xf32>
    %145 = vector.extract_strided_slice %139 {offsets = [0, 256], sizes = [8, 128], strides = [1, 1]} : vector<8x384xf32> to vector<8x128xf32>
    %146 = arith.addf %140, %143 : vector<8x128xf32>
    %147 = arith.negf %146 : vector<8x128xf32>
    %148 = math.exp %147 : vector<8x128xf32>
    %cst_41 = arith.constant 1.000000e+00 : f32
    %149 = vector.broadcast %cst_41 : f32 to vector<8x128xf32>
    %150 = arith.addf %149, %148 : vector<8x128xf32>
    %151 = arith.divf %149, %150 : vector<8x128xf32>
    %152 = arith.addf %141, %144 : vector<8x128xf32>
    %153 = arith.negf %152 : vector<8x128xf32>
    %154 = math.exp %153 : vector<8x128xf32>
    %cst_42 = arith.constant 1.000000e+00 : f32
    %155 = vector.broadcast %cst_42 : f32 to vector<8x128xf32>
    %156 = arith.addf %155, %154 : vector<8x128xf32>
    %157 = arith.divf %155, %156 : vector<8x128xf32>
    %158 = arith.addf %145, %5 : vector<8x128xf32>
    %159 = arith.mulf %151, %158 : vector<8x128xf32>
    %160 = arith.addf %142, %159 : vector<8x128xf32>
    %161 = math.tanh %160 : vector<8x128xf32>
    %cst_43 = arith.constant 1.000000e+00 : f32
    %162 = vector.broadcast %cst_43 : f32 to vector<8x128xf32>
    %163 = arith.subf %162, %157 : vector<8x128xf32>
    %164 = arith.mulf %163, %161 : vector<8x128xf32>
    %165 = arith.mulf %157, %134 : vector<8x128xf32>
    %166 = arith.addf %164, %165 : vector<8x128xf32>
    %c5_i32 = arith.constant 5 : i32
    %167 = arith.index_cast %c5_i32 : i32 to index
    %c0_44 = arith.constant 0 : index
    %c0_45 = arith.constant 0 : index
    %168 = vector.load %arg2[%167, %c0_44, %c0_45] : memref<8x8x384xf32, #tpu.memory_space<vmem>>, vector<1x8x384xf32>
    %169 = vector.shape_cast %168 : vector<1x8x384xf32> to vector<8x384xf32>
    %c0_46 = arith.constant 0 : index
    %c0_47 = arith.constant 0 : index
    %170 = vector.load %arg3[%c0_46, %c0_47] : memref<128x384xf32, #tpu.memory_space<vmem>>, vector<128x384xf32>
    %cst_48 = arith.constant dense<0.000000e+00> : vector<8x384xf32>
    %171 = tpu.matmul %166, %170, %cst_48 {dimension_numbers = #tpu.dot_dimension_numbers<[1], [0], [0], [1], [0, 0, 1, 1], [], []>} : vector<8x128xf32>, vector<128x384xf32>, vector<8x384xf32> -> vector<8x384xf32>
    %172 = vector.extract_strided_slice %169 {offsets = [0, 0], sizes = [8, 128], strides = [1, 1]} : vector<8x384xf32> to vector<8x128xf32>
    %173 = vector.extract_strided_slice %169 {offsets = [0, 128], sizes = [8, 128], strides = [1, 1]} : vector<8x384xf32> to vector<8x128xf32>
    %174 = vector.extract_strided_slice %169 {offsets = [0, 256], sizes = [8, 128], strides = [1, 1]} : vector<8x384xf32> to vector<8x128xf32>
    %175 = vector.extract_strided_slice %171 {offsets = [0, 0], sizes = [8, 128], strides = [1, 1]} : vector<8x384xf32> to vector<8x128xf32>
    %176 = vector.extract_strided_slice %171 {offsets = [0, 128], sizes = [8, 128], strides = [1, 1]} : vector<8x384xf32> to vector<8x128xf32>
    %177 = vector.extract_strided_slice %171 {offsets = [0, 256], sizes = [8, 128], strides = [1, 1]} : vector<8x384xf32> to vector<8x128xf32>
    %178 = arith.addf %172, %175 : vector<8x128xf32>
    %179 = arith.negf %178 : vector<8x128xf32>
    %180 = math.exp %179 : vector<8x128xf32>
    %cst_49 = arith.constant 1.000000e+00 : f32
    %181 = vector.broadcast %cst_49 : f32 to vector<8x128xf32>
    %182 = arith.addf %181, %180 : vector<8x128xf32>
    %183 = arith.divf %181, %182 : vector<8x128xf32>
    %184 = arith.addf %173, %176 : vector<8x128xf32>
    %185 = arith.negf %184 : vector<8x128xf32>
    %186 = math.exp %185 : vector<8x128xf32>
    %cst_50 = arith.constant 1.000000e+00 : f32
    %187 = vector.broadcast %cst_50 : f32 to vector<8x128xf32>
    %188 = arith.addf %187, %186 : vector<8x128xf32>
    %189 = arith.divf %187, %188 : vector<8x128xf32>
    %190 = arith.addf %177, %5 : vector<8x128xf32>
    %191 = arith.mulf %183, %190 : vector<8x128xf32>
    %192 = arith.addf %174, %191 : vector<8x128xf32>
    %193 = math.tanh %192 : vector<8x128xf32>
    %cst_51 = arith.constant 1.000000e+00 : f32
    %194 = vector.broadcast %cst_51 : f32 to vector<8x128xf32>
    %195 = arith.subf %194, %189 : vector<8x128xf32>
    %196 = arith.mulf %195, %193 : vector<8x128xf32>
    %197 = arith.mulf %189, %166 : vector<8x128xf32>
    %198 = arith.addf %196, %197 : vector<8x128xf32>
    %c6_i32 = arith.constant 6 : i32
    %199 = arith.index_cast %c6_i32 : i32 to index
    %c0_52 = arith.constant 0 : index
    %c0_53 = arith.constant 0 : index
    %200 = vector.load %arg2[%199, %c0_52, %c0_53] : memref<8x8x384xf32, #tpu.memory_space<vmem>>, vector<1x8x384xf32>
    %201 = vector.shape_cast %200 : vector<1x8x384xf32> to vector<8x384xf32>
    %c0_54 = arith.constant 0 : index
    %c0_55 = arith.constant 0 : index
    %202 = vector.load %arg3[%c0_54, %c0_55] : memref<128x384xf32, #tpu.memory_space<vmem>>, vector<128x384xf32>
    %cst_56 = arith.constant dense<0.000000e+00> : vector<8x384xf32>
    %203 = tpu.matmul %198, %202, %cst_56 {dimension_numbers = #tpu.dot_dimension_numbers<[1], [0], [0], [1], [0, 0, 1, 1], [], []>} : vector<8x128xf32>, vector<128x384xf32>, vector<8x384xf32> -> vector<8x384xf32>
    %204 = vector.extract_strided_slice %201 {offsets = [0, 0], sizes = [8, 128], strides = [1, 1]} : vector<8x384xf32> to vector<8x128xf32>
    %205 = vector.extract_strided_slice %201 {offsets = [0, 128], sizes = [8, 128], strides = [1, 1]} : vector<8x384xf32> to vector<8x128xf32>
    %206 = vector.extract_strided_slice %201 {offsets = [0, 256], sizes = [8, 128], strides = [1, 1]} : vector<8x384xf32> to vector<8x128xf32>
    %207 = vector.extract_strided_slice %203 {offsets = [0, 0], sizes = [8, 128], strides = [1, 1]} : vector<8x384xf32> to vector<8x128xf32>
    %208 = vector.extract_strided_slice %203 {offsets = [0, 128], sizes = [8, 128], strides = [1, 1]} : vector<8x384xf32> to vector<8x128xf32>
    %209 = vector.extract_strided_slice %203 {offsets = [0, 256], sizes = [8, 128], strides = [1, 1]} : vector<8x384xf32> to vector<8x128xf32>
    %210 = arith.addf %204, %207 : vector<8x128xf32>
    %211 = arith.negf %210 : vector<8x128xf32>
    %212 = math.exp %211 : vector<8x128xf32>
    %cst_57 = arith.constant 1.000000e+00 : f32
    %213 = vector.broadcast %cst_57 : f32 to vector<8x128xf32>
    %214 = arith.addf %213, %212 : vector<8x128xf32>
    %215 = arith.divf %213, %214 : vector<8x128xf32>
    %216 = arith.addf %205, %208 : vector<8x128xf32>
    %217 = arith.negf %216 : vector<8x128xf32>
    %218 = math.exp %217 : vector<8x128xf32>
    %cst_58 = arith.constant 1.000000e+00 : f32
    %219 = vector.broadcast %cst_58 : f32 to vector<8x128xf32>
    %220 = arith.addf %219, %218 : vector<8x128xf32>
    %221 = arith.divf %219, %220 : vector<8x128xf32>
    %222 = arith.addf %209, %5 : vector<8x128xf32>
    %223 = arith.mulf %215, %222 : vector<8x128xf32>
    %224 = arith.addf %206, %223 : vector<8x128xf32>
    %225 = math.tanh %224 : vector<8x128xf32>
    %cst_59 = arith.constant 1.000000e+00 : f32
    %226 = vector.broadcast %cst_59 : f32 to vector<8x128xf32>
    %227 = arith.subf %226, %221 : vector<8x128xf32>
    %228 = arith.mulf %227, %225 : vector<8x128xf32>
    %229 = arith.mulf %221, %198 : vector<8x128xf32>
    %230 = arith.addf %228, %229 : vector<8x128xf32>
    %c7_i32 = arith.constant 7 : i32
    %231 = arith.index_cast %c7_i32 : i32 to index
    %c0_60 = arith.constant 0 : index
    %c0_61 = arith.constant 0 : index
    %232 = vector.load %arg2[%231, %c0_60, %c0_61] : memref<8x8x384xf32, #tpu.memory_space<vmem>>, vector<1x8x384xf32>
    %233 = vector.shape_cast %232 : vector<1x8x384xf32> to vector<8x384xf32>
    %c0_62 = arith.constant 0 : index
    %c0_63 = arith.constant 0 : index
    %234 = vector.load %arg3[%c0_62, %c0_63] : memref<128x384xf32, #tpu.memory_space<vmem>>, vector<128x384xf32>
    %cst_64 = arith.constant dense<0.000000e+00> : vector<8x384xf32>
    %235 = tpu.matmul %230, %234, %cst_64 {dimension_numbers = #tpu.dot_dimension_numbers<[1], [0], [0], [1], [0, 0, 1, 1], [], []>} : vector<8x128xf32>, vector<128x384xf32>, vector<8x384xf32> -> vector<8x384xf32>
    %236 = vector.extract_strided_slice %233 {offsets = [0, 0], sizes = [8, 128], strides = [1, 1]} : vector<8x384xf32> to vector<8x128xf32>
    %237 = vector.extract_strided_slice %233 {offsets = [0, 128], sizes = [8, 128], strides = [1, 1]} : vector<8x384xf32> to vector<8x128xf32>
    %238 = vector.extract_strided_slice %233 {offsets = [0, 256], sizes = [8, 128], strides = [1, 1]} : vector<8x384xf32> to vector<8x128xf32>
    %239 = vector.extract_strided_slice %235 {offsets = [0, 0], sizes = [8, 128], strides = [1, 1]} : vector<8x384xf32> to vector<8x128xf32>
    %240 = vector.extract_strided_slice %235 {offsets = [0, 128], sizes = [8, 128], strides = [1, 1]} : vector<8x384xf32> to vector<8x128xf32>
    %241 = vector.extract_strided_slice %235 {offsets = [0, 256], sizes = [8, 128], strides = [1, 1]} : vector<8x384xf32> to vector<8x128xf32>
    %242 = arith.addf %236, %239 : vector<8x128xf32>
    %243 = arith.negf %242 : vector<8x128xf32>
    %244 = math.exp %243 : vector<8x128xf32>
    %cst_65 = arith.constant 1.000000e+00 : f32
    %245 = vector.broadcast %cst_65 : f32 to vector<8x128xf32>
    %246 = arith.addf %245, %244 : vector<8x128xf32>
    %247 = arith.divf %245, %246 : vector<8x128xf32>
    %248 = arith.addf %237, %240 : vector<8x128xf32>
    %249 = arith.negf %248 : vector<8x128xf32>
    %250 = math.exp %249 : vector<8x128xf32>
    %cst_66 = arith.constant 1.000000e+00 : f32
    %251 = vector.broadcast %cst_66 : f32 to vector<8x128xf32>
    %252 = arith.addf %251, %250 : vector<8x128xf32>
    %253 = arith.divf %251, %252 : vector<8x128xf32>
    %254 = arith.addf %241, %5 : vector<8x128xf32>
    %255 = arith.mulf %247, %254 : vector<8x128xf32>
    %256 = arith.addf %238, %255 : vector<8x128xf32>
    %257 = math.tanh %256 : vector<8x128xf32>
    %cst_67 = arith.constant 1.000000e+00 : f32
    %258 = vector.broadcast %cst_67 : f32 to vector<8x128xf32>
    %259 = arith.subf %258, %253 : vector<8x128xf32>
    %260 = arith.mulf %259, %257 : vector<8x128xf32>
    %261 = arith.mulf %253, %230 : vector<8x128xf32>
    %262 = arith.addf %260, %261 : vector<8x128xf32>
    %c8_i32 = arith.constant 8 : i32
    %c0_68 = arith.constant 0 : index
    %c0_69 = arith.constant 0 : index
    %263 = vector.load %arg5[%c0_68, %c0_69] : memref<8x128xf32, #tpu.memory_space<vmem>>, vector<8x128xf32>
    tpu.vector_store %arg5[%c0_68, %c0_69], %262 {strides = array<i32>} : memref<8x128xf32, #tpu.memory_space<vmem>>, vector<8x128xf32>,
    return
  }
  func.func @transform_0(%arg0: i32, %arg1: i32) -> (i32, i32, i32) {
    %c0_i32 = arith.constant 0 : i32
    %c0_i32_0 = arith.constant 0 : i32
    return %arg1, %arg0, %c0_i32 : i32, i32, i32
  }
  func.func @transform_1(%arg0: i32, %arg1: i32) -> (i32, i32) {
    %c0_i32 = arith.constant 0 : i32
    %c0_i32_0 = arith.constant 0 : i32
    %c0_i32_1 = arith.constant 0 : i32
    return %c0_i32, %c0_i32_0 : i32, i32
  }
  func.func @transform_2(%arg0: i32, %arg1: i32) -> (i32, i32) {
    %c0_i32 = arith.constant 0 : i32
    %c0_i32_0 = arith.constant 0 : i32
    %c0_i32_1 = arith.constant 0 : i32
    return %c0_i32, %c0_i32_0 : i32, i32
  }
  func.func @transform_3(%arg0: i32, %arg1: i32) -> (i32, i32) {
    %c0_i32 = arith.constant 0 : i32
    %c0_i32_0 = arith.constant 0 : i32
    return %arg0, %c0_i32 : i32, i32
  }
}

</mosaic_0001>

<llo_original>
// kernel: tpu_custom_call.1
$region0: #{tpu_custom_call.1}
  #allocation0 [shape = 'u32[]', space=smem, size = 0x4, offset = 0x4, fixed_abs, tag = 'smem constant byte address 0x4 - core index']
  #allocation1 [shape = 'u32[144,128]{1,0:T(1,128)}', space=vmem, size = 0x12000, scoped, tag = 'internal scratch']
  %s0 = inlined_call_operand.hbm [shape: f32[8,8,384], index: 0, kind: input, shape index: {}]
  %s1 = inlined_call_operand.hbm [shape: f32[128,384], index: 1, kind: input, shape index: {}]
  %s2 = inlined_call_operand.vmem [shape: f32[1,128], index: 2, kind: input, shape index: {}]
  %s3 = inlined_call_operand.hbm [shape: f32[8,128], index: 3, kind: output, shape index: {}]
  %s4 = sld [smem:[#allocation0]]
  $region34: #{tpu_custom_call.1} parent=0
    _
  %s6 = ssub.s32 1, %s4
  %s7 = scalar_select 0, %s6, %s4
  $region1: #{tpu_custom_call.1} parent=0
    #allocation2 [shape = 'u8[98304]{0}', space=vmem, size = 0x18000, scoped, tag = 'input window, operand 0, single buffered']
    #allocation3 [shape = 's32[1]{0}', space=sflag, size = 0x4, scoped, tag = 'scoped memory for tpu_custom_call.1']
    #allocation4 [shape = 's32[1]{0}', space=sflag, size = 0x4, scoped, tag = 'scoped memory for tpu_custom_call.1']
    #allocation5 [shape = 'u8[196608]{0}', space=vmem, size = 0x30000, scoped, tag = 'input window, operand 1, single buffered']
    #allocation6 [shape = 's32[1]{0}', space=sflag, size = 0x4, scoped, tag = 'scoped memory for tpu_custom_call.1']
    #allocation7 [shape = 'u8[4096]{0}', space=vmem, size = 0x1000, scoped, tag = 'output window, operand 0, single buffered']
    %8 = vsyncpa [#allocation3], 0
    %9 = vsyncpa [#allocation6], 0
    %10 = vsyncpa [#allocation4], 0
    // Predicated region
    $region2: #{tpu_custom_call.1} parent=1 // pred_check
      _
    $region3: #{tpu_custom_call.1} parent=1 // pred_check_branch
      %12 = sbr.rel (0) target = $region5
    $region4: #{tpu_custom_call.1} parent=1 // pred_region
      %s14 = ssub.s32 3072, 3072
      %15 = vsyncadd [#allocation3], %s14
      %s16 = sshll.u32 [#allocation2], 4
      %s17 = int_to_ptr.vmem [resolvable:$true] %s16
      %22 = dma.hbm_to_vmem [thread:$0]  %s0, 3072, %s17, [#allocation3], 384, 384, 24
    $region5: #{tpu_custom_call.1} parent=1 // pred_fallthru
      _
    // Predicated region
    $region6: #{tpu_custom_call.1} parent=1 // pred_check
      _
    $region7: #{tpu_custom_call.1} parent=1 // pred_check_branch
      %24 = sbr.rel (0) target = $region9
    $region8: #{tpu_custom_call.1} parent=1 // pred_region
      %s26 = ssub.s32 6144, 6144
      %27 = vsyncadd [#allocation6], %s26
      %s28 = sshll.u32 [#allocation5], 4
      %s29 = int_to_ptr.vmem [resolvable:$true] %s28
      %34 = dma.hbm_to_vmem [thread:$0]  %s1, 6144, %s29, [#allocation6], 384, 384, 24
    $region9: #{tpu_custom_call.1} parent=1 // pred_fallthru
      _
    // Predicated region
    $region10: #{tpu_custom_call.1} parent=1 // pred_check
      _
    $region11: #{tpu_custom_call.1} parent=1 // pred_check_branch
      %36 = sbr.rel (0) target = $region13
    $region12: #{tpu_custom_call.1} parent=1 // pred_region
      _
    $region13: #{tpu_custom_call.1} parent=1 // pred_fallthru
      _
    // Predicated region
    $region14: #{tpu_custom_call.1} parent=1 // pred_check
      _
    $region15: #{tpu_custom_call.1} parent=1 // pred_check_branch
      %38 = sbr.rel (0) target = $region17
    $region16: #{tpu_custom_call.1} parent=1 // pred_region
      %39 = dma.done [#allocation3], 3072
    $region17: #{tpu_custom_call.1} parent=1 // pred_fallthru
      _
    // Predicated region
    $region18: #{tpu_custom_call.1} parent=1 // pred_check
      _
    $region19: #{tpu_custom_call.1} parent=1 // pred_check_branch
      %41 = sbr.rel (0) target = $region21
    $region20: #{tpu_custom_call.1} parent=1 // pred_region
      %42 = dma.done [#allocation6], 6144
    $region21: #{tpu_custom_call.1} parent=1 // pred_fallthru
      _
    %p43 = scmp.eq.s32.totalorder 0, 0
    // Predicated region
    $region22: #{tpu_custom_call.1} parent=1 // pred_check
      %p44 = pneg %p43
    $region23: #{tpu_custom_call.1} parent=1 // pred_check_branch
      %46 = sbr.rel (%p44) target = $region25
    $region24: #{tpu_custom_call.1} parent=1 // pred_region
      %47 = vst [vmem:[#allocation7] sm:$0xff] 0.0
    $region25: #{tpu_custom_call.1} parent=1 // pred_fallthru
      _
    %v48 = vld [vmem:[%s2] sm:$0x1]
    %v50 = vlaneseq
    %v51 = vshrl.u32 %v50, 7
    %v52 = vsub.s32 0, %v51
    %v53 = vrot.slane %v48, %v52
    %v55 = vld [vmem:[#allocation7] sm:$0xff]
    %v56 = vld [vmem:[#allocation2] sm:$0xff]
    %v57 = vld [vmem:[#allocation2 + $0x8] sm:$0xff]
    %v58 = vld [vmem:[#allocation2 + $0x10] sm:$0xff]
    %v59 = vld [vmem:[#allocation5] sm:$0xff]
    %v60 = vld [vmem:[#allocation5 + $0x8] sm:$0xff]
    %v61 = vld [vmem:[#allocation5 + $0x10] sm:$0xff]
    %v62 = vld [vmem:[#allocation5 + $0x18] sm:$0xff]
    %v63 = vld [vmem:[#allocation5 + $0x20] sm:$0xff]
    %v64 = vld [vmem:[#allocation5 + $0x28] sm:$0xff]
    %v65 = vld [vmem:[#allocation5 + $0x30] sm:$0xff]
    %v66 = vld [vmem:[#allocation5 + $0x38] sm:$0xff]
    %v67 = vld [vmem:[#allocation5 + $0x40] sm:$0xff]
    %v68 = vld [vmem:[#allocation5 + $0x48] sm:$0xff]
    %v69 = vld [vmem:[#allocation5 + $0x50] sm:$0xff]
    %v70 = vld [vmem:[#allocation5 + $0x58] sm:$0xff]
    %v71 = vld [vmem:[#allocation5 + $0x60] sm:$0xff]
    %v72 = vld [vmem:[#allocation5 + $0x68] sm:$0xff]
    %v73 = vld [vmem:[#allocation5 + $0x70] sm:$0xff]
    %v74 = vld [vmem:[#allocation5 + $0x78] sm:$0xff]
    %v75 = vld [vmem:[#allocation5 + $0x80] sm:$0xff]
    %v76 = vld [vmem:[#allocation5 + $0x88] sm:$0xff]
    %v77 = vld [vmem:[#allocation5 + $0x90] sm:$0xff]
    %v78 = vld [vmem:[#allocation5 + $0x98] sm:$0xff]
    %v79 = vld [vmem:[#allocation5 + $0xa0] sm:$0xff]
    %v80 = vld [vmem:[#allocation5 + $0xa8] sm:$0xff]
    %v81 = vld [vmem:[#allocation5 + $0xb0] sm:$0xff]
    %v82 = vld [vmem:[#allocation5 + $0xb8] sm:$0xff]
    %v83 = vld [vmem:[#allocation5 + $0xc0] sm:$0xff]
    %v84 = vld [vmem:[#allocation5 + $0xc8] sm:$0xff]
    %v85 = vld [vmem:[#allocation5 + $0xd0] sm:$0xff]
    %v86 = vld [vmem:[#allocation5 + $0xd8] sm:$0xff]
    %v87 = vld [vmem:[#allocation5 + $0xe0] sm:$0xff]
    %v88 = vld [vmem:[#allocation5 + $0xe8] sm:$0xff]
    %v89 = vld [vmem:[#allocation5 + $0xf0] sm:$0xff]
    %v90 = vld [vmem:[#allocation5 + $0xf8] sm:$0xff]
    %v91 = vld [vmem:[#allocation5 + $0x100] sm:$0xff]
    %v92 = vld [vmem:[#allocation5 + $0x108] sm:$0xff]
    %v93 = vld [vmem:[#allocation5 + $0x110] sm:$0xff]
    %v94 = vld [vmem:[#allocation5 + $0x118] sm:$0xff]
    %v95 = vld [vmem:[#allocation5 + $0x120] sm:$0xff]
    %v96 = vld [vmem:[#allocation5 + $0x128] sm:$0xff]
    %v97 = vld [vmem:[#allocation5 + $0x130] sm:$0xff]
    %v98 = vld [vmem:[#allocation5 + $0x138] sm:$0xff]
    %v99 = vld [vmem:[#allocation5 + $0x140] sm:$0xff]
    %v100 = vld [vmem:[#allocation5 + $0x148] sm:$0xff]
    %v101 = vld [vmem:[#allocation5 + $0x150] sm:$0xff]
    %v102 = vld [vmem:[#allocation5 + $0x158] sm:$0xff]
    %v103 = vld [vmem:[#allocation5 + $0x160] sm:$0xff]
    %v104 = vld [vmem:[#allocation5 + $0x168] sm:$0xff]
    %v105 = vld [vmem:[#allocation5 + $0x170] sm:$0xff]
    %v106 = vld [vmem:[#allocation5 + $0x178] sm:$0xff]
    %107 = vmatprep.subr.mxu0 %v60
    %108 = vmatpush1.msra.mxu0 %v59
    %109 = vmatprep.subr.mxu0 %v63
    %110 = vmatpush1.msra.mxu0 %v62
    %111 = vmatprep.subr.mxu0 %v66
    %112 = vmatpush1.msra.mxu0 %v65
    %113 = vmatprep.subr.mxu0 %v69
    %114 = vmatpush1.msra.mxu0 %v68
    %115 = vmatprep.subr.mxu0 %v72
    %116 = vmatpush1.msra.mxu0 %v71
    %117 = vmatprep.subr.mxu0 %v75
    %118 = vmatpush1.msra.mxu0 %v74
    %119 = vmatprep.subr.mxu0 %v78
    %120 = vmatpush1.msra.mxu0 %v77
    %121 = vmatprep.subr.mxu0 %v81
    %122 = vmatpush1.msra.mxu0 %v80
    %123 = vmatprep.subr.mxu0 %v84
    %124 = vmatpush1.msra.mxu0 %v83
    %125 = vmatprep.subr.mxu0 %v87
    %126 = vmatpush1.msra.mxu0 %v86
    %127 = vmatprep.subr.mxu0 %v90
    %128 = vmatpush1.msra.mxu0 %v89
    %129 = vmatprep.subr.mxu0 %v93
    %130 = vmatpush1.msra.mxu0 %v92
    %131 = vmatprep.subr.mxu0 %v96
    %132 = vmatpush1.msra.mxu0 %v95
    %133 = vmatprep.subr.mxu0 %v99
    %134 = vmatpush1.msra.mxu0 %v98
    %135 = vmatprep.subr.mxu0 %v102
    %136 = vmatpush1.msra.mxu0 %v101
    %137 = vmatprep.subr.mxu0 %v105
    %138 = vmatpush1.msra.mxu0 %v104
    %139 = vmatprep.subr.mxu0 0.0
    %140 = vmatpush1.msra.mxu0 0.0
    %141 = vmatprep.subr.mxu0 0.0
    %142 = vmatpush1.msra.mxu0 0.0
    %143 = vmatprep.subr.mxu0 0.0
    %144 = vmatpush1.msra.mxu0 0.0
    %145 = vmatprep.subr.mxu0 0.0
    %146 = vmatpush1.msra.mxu0 0.0
    %147 = vmatprep.subr.mxu0 0.0
    %148 = vmatpush1.msra.mxu0 0.0
    %149 = vmatprep.subr.mxu0 0.0
    %150 = vmatpush1.msra.mxu0 0.0
    %151 = vmatprep.subr.mxu0 0.0
    %152 = vmatpush1.msra.mxu0 0.0
    %153 = vmatprep.subr.mxu0 0.0
    %154 = vmatpush1.msra.mxu0 0.0
    %155 = vmatprep.subr.mxu0 0.0
    %156 = vmatpush1.msra.mxu0 0.0
    %157 = vmatprep.subr.mxu0 0.0
    %158 = vmatpush1.msra.mxu0 0.0
    %159 = vmatprep.subr.mxu0 0.0
    %160 = vmatpush1.msra.mxu0 0.0
    %161 = vmatprep.subr.mxu0 0.0
    %162 = vmatpush1.msra.mxu0 0.0
    %163 = vmatprep.subr.mxu0 0.0
    %164 = vmatpush1.msra.mxu0 0.0
    %165 = vmatprep.subr.mxu0 0.0
    %166 = vmatpush1.msra.mxu0 0.0
    %167 = vmatprep.subr.mxu0 0.0
    %168 = vmatpush1.msra.mxu0 0.0
    %169 = vmatprep.subr.mxu0 0.0
    %170 = vmatpush1.msra.mxu0 0.0
    %171 = vmatprep.mubr.f32.mxu0 0.0
    %172 = vmatmul.mubr.f32.gmra.mrb[0].mxu0 %v55
    %v173 = vpop.f32.mrb[0].mxu0
    %v174 = vadd.f32 0.0, %v173
    %v175 = vpop.f32.mrb[0].mxu0
    %v176 = vadd.f32 0.0, %v175
    %177 = vdwg.mxu0
    %178 = vmatprep.subr.mxu0 0.0
    %179 = vmatpush1.msra.mxu0 %v61
    %180 = vmatprep.subr.mxu0 0.0
    %181 = vmatpush1.msra.mxu0 %v64
    %182 = vmatprep.subr.mxu0 0.0
    %183 = vmatpush1.msra.mxu0 %v67
    %184 = vmatprep.subr.mxu0 0.0
    %185 = vmatpush1.msra.mxu0 %v70
    %186 = vmatprep.subr.mxu0 0.0
    %187 = vmatpush1.msra.mxu0 %v73
    %188 = vmatprep.subr.mxu0 0.0
    %189 = vmatpush1.msra.mxu0 %v76
    %190 = vmatprep.subr.mxu0 0.0
    %191 = vmatpush1.msra.mxu0 %v79
    %192 = vmatprep.subr.mxu0 0.0
    %193 = vmatpush1.msra.mxu0 %v82
    %194 = vmatprep.subr.mxu0 0.0
    %195 = vmatpush1.msra.mxu0 %v85
    %196 = vmatprep.subr.mxu0 0.0
    %197 = vmatpush1.msra.mxu0 %v88
    %198 = vmatprep.subr.mxu0 0.0
    %199 = vmatpush1.msra.mxu0 %v91
    %200 = vmatprep.subr.mxu0 0.0
    %201 = vmatpush1.msra.mxu0 %v94
    %202 = vmatprep.subr.mxu0 0.0
    %203 = vmatpush1.msra.mxu0 %v97
    %204 = vmatprep.subr.mxu0 0.0
    %205 = vmatpush1.msra.mxu0 %v100
    %206 = vmatprep.subr.mxu0 0.0
    %207 = vmatpush1.msra.mxu0 %v103
    %208 = vmatprep.subr.mxu0 0.0
    %209 = vmatpush1.msra.mxu0 %v106
    %210 = vmatprep.subr.mxu0 0.0
    %211 = vmatpush1.msra.mxu0 0.0
    %212 = vmatprep.subr.mxu0 0.0
    %213 = vmatpush1.msra.mxu0 0.0
    %214 = vmatprep.subr.mxu0 0.0
    %215 = vmatpush1.msra.mxu0 0.0
    %216 = vmatprep.subr.mxu0 0.0
    %217 = vmatpush1.msra.mxu0 0.0
    %218 = vmatprep.subr.mxu0 0.0
    %219 = vmatpush1.msra.mxu0 0.0
    %220 = vmatprep.subr.mxu0 0.0
    %221 = vmatpush1.msra.mxu0 0.0
    %222 = vmatprep.subr.mxu0 0.0
    %223 = vmatpush1.msra.mxu0 0.0
    %224 = vmatprep.subr.mxu0 0.0
    %225 = vmatpush1.msra.mxu0 0.0
    %226 = vmatprep.subr.mxu0 0.0
    %227 = vmatpush1.msra.mxu0 0.0
    %228 = vmatprep.subr.mxu0 0.0
    %229 = vmatpush1.msra.mxu0 0.0
    %230 = vmatprep.subr.mxu0 0.0
    %231 = vmatpush1.msra.mxu0 0.0
    %232 = vmatprep.subr.mxu0 0.0
    %233 = vmatpush1.msra.mxu0 0.0
    %234 = vmatprep.subr.mxu0 0.0
    %235 = vmatpush1.msra.mxu0 0.0
    %236 = vmatprep.subr.mxu0 0.0
    %237 = vmatpush1.msra.mxu0 0.0
    %238 = vmatprep.subr.mxu0 0.0
    %239 = vmatpush1.msra.mxu0 0.0
    %240 = vmatprep.subr.mxu0 0.0
    %241 = vmatpush1.msra.mxu0 0.0
    %242 = vmatprep.mubr.f32.mxu0 0.0
    %243 = vmatmul.mubr.f32.gmra.mrb[0].mxu0 %v55
    %v244 = vpop.f32.mrb[0].mxu0
    %v245 = vadd.f32 0.0, %v244
    %v246 = vpop.f32.mrb[0].mxu0
    %247 = vdwg.mxu0
    %v248 = vadd.f32 %v56, %v174
    %v249 = vxor.u32 %v248, 2147483648
    %v250 = vmul.f32 %v249, 1.442695
    %v251 = vpow.pop %v250
    %v252 = vadd.f32 %v251, 1.0
    %v253 = vrcp.pop %v252
    %v254 = vmul.f32 1.0, %v253
    %v255 = vadd.f32 %v57, %v176
    %v256 = vxor.u32 %v255, 2147483648
    %v257 = vmul.f32 %v256, 1.442695
    %v258 = vpow.pop %v257
    %v259 = vadd.f32 %v258, 1.0
    %v260 = vrcp.pop %v259
    %v261 = vmul.f32 1.0, %v260
    %v262 = vadd.f32 %v245, %v53
    %v263 = vmul.f32 %v254, %v262
    %v264 = vadd.f32 %v58, %v263
    %v265 = vtanh.pop %v264
    %v266 = vsub.f32 1.0, %v261
    %v267 = vmul.f32 %v266, %v265
    %v268 = vmul.f32 %v261, %v55
    %v269 = vadd.f32 %v267, %v268
    %s270 = scalar_lea.vmem [#allocation2], 24
    %v271 = vld [vmem:[%s270] sm:$0xff]
    %v272 = vld [vmem:[%s270 + $0x8] sm:$0xff]
    %v273 = vld [vmem:[%s270 + $0x10] sm:$0xff]
    %274 = vmatprep.subr.mxu0 %v60
    %275 = vmatpush1.msra.mxu0 %v59
    %276 = vmatprep.subr.mxu0 %v63
    %277 = vmatpush1.msra.mxu0 %v62
    %278 = vmatprep.subr.mxu0 %v66
    %279 = vmatpush1.msra.mxu0 %v65
    %280 = vmatprep.subr.mxu0 %v69
    %281 = vmatpush1.msra.mxu0 %v68
    %282 = vmatprep.subr.mxu0 %v72
    %283 = vmatpush1.msra.mxu0 %v71
    %284 = vmatprep.subr.mxu0 %v75
    %285 = vmatpush1.msra.mxu0 %v74
    %286 = vmatprep.subr.mxu0 %v78
    %287 = vmatpush1.msra.mxu0 %v77
    %288 = vmatprep.subr.mxu0 %v81
    %289 = vmatpush1.msra.mxu0 %v80
    %290 = vmatprep.subr.mxu0 %v84
    %291 = vmatpush1.msra.mxu0 %v83
    %292 = vmatprep.subr.mxu0 %v87
    %293 = vmatpush1.msra.mxu0 %v86
    %294 = vmatprep.subr.mxu0 %v90
    %295 = vmatpush1.msra.mxu0 %v89
    %296 = vmatprep.subr.mxu0 %v93
    %297 = vmatpush1.msra.mxu0 %v92
    %298 = vmatprep.subr.mxu0 %v96
    %299 = vmatpush1.msra.mxu0 %v95
    %300 = vmatprep.subr.mxu0 %v99
    %301 = vmatpush1.msra.mxu0 %v98
    %302 = vmatprep.subr.mxu0 %v102
    %303 = vmatpush1.msra.mxu0 %v101
    %304 = vmatprep.subr.mxu0 %v105
    %305 = vmatpush1.msra.mxu0 %v104
    %306 = vmatprep.subr.mxu0 0.0
    %307 = vmatpush1.msra.mxu0 0.0
    %308 = vmatprep.subr.mxu0 0.0
    %309 = vmatpush1.msra.mxu0 0.0
    %310 = vmatprep.subr.mxu0 0.0
    %311 = vmatpush1.msra.mxu0 0.0
    %312 = vmatprep.subr.mxu0 0.0
    %313 = vmatpush1.msra.mxu0 0.0
    %314 = vmatprep.subr.mxu0 0.0
    %315 = vmatpush1.msra.mxu0 0.0
    %316 = vmatprep.subr.mxu0 0.0
    %317 = vmatpush1.msra.mxu0 0.0
    %318 = vmatprep.subr.mxu0 0.0
    %319 = vmatpush1.msra.mxu0 0.0
    %320 = vmatprep.subr.mxu0 0.0
    %321 = vmatpush1.msra.mxu0 0.0
    %322 = vmatprep.subr.mxu0 0.0
    %323 = vmatpush1.msra.mxu0 0.0
    %324 = vmatprep.subr.mxu0 0.0
    %325 = vmatpush1.msra.mxu0 0.0
    %326 = vmatprep.subr.mxu0 0.0
    %327 = vmatpush1.msra.mxu0 0.0
    %328 = vmatprep.subr.mxu0 0.0
    %329 = vmatpush1.msra.mxu0 0.0
    %330 = vmatprep.subr.mxu0 0.0
    %331 = vmatpush1.msra.mxu0 0.0
    %332 = vmatprep.subr.mxu0 0.0
    %333 = vmatpush1.msra.mxu0 0.0
    %334 = vmatprep.subr.mxu0 0.0
    %335 = vmatpush1.msra.mxu0 0.0
    %336 = vmatprep.subr.mxu0 0.0
    %337 = vmatpush1.msra.mxu0 0.0
    %338 = vmatprep.mubr.f32.mxu0 0.0
    %339 = vmatmul.mubr.f32.gmra.mrb[0].mxu0 %v269
    %v340 = vpop.f32.mrb[0].mxu0
    %v341 = vadd.f32 0.0, %v340
    %v342 = vpop.f32.mrb[0].mxu0
    %v343 = vadd.f32 0.0, %v342
    %344 = vdwg.mxu0
    %345 = vmatprep.subr.mxu0 0.0
    %346 = vmatpush1.msra.mxu0 %v61
    %347 = vmatprep.subr.mxu0 0.0
    %348 = vmatpush1.msra.mxu0 %v64
    %349 = vmatprep.subr.mxu0 0.0
    %350 = vmatpush1.msra.mxu0 %v67
    %351 = vmatprep.subr.mxu0 0.0
    %352 = vmatpush1.msra.mxu0 %v70
    %353 = vmatprep.subr.mxu0 0.0
    %354 = vmatpush1.msra.mxu0 %v73
    %355 = vmatprep.subr.mxu0 0.0
    %356 = vmatpush1.msra.mxu0 %v76
    %357 = vmatprep.subr.mxu0 0.0
    %358 = vmatpush1.msra.mxu0 %v79
    %359 = vmatprep.subr.mxu0 0.0
    %360 = vmatpush1.msra.mxu0 %v82
    %361 = vmatprep.subr.mxu0 0.0
    %362 = vmatpush1.msra.mxu0 %v85
    %363 = vmatprep.subr.mxu0 0.0
    %364 = vmatpush1.msra.mxu0 %v88
    %365 = vmatprep.subr.mxu0 0.0
    %366 = vmatpush1.msra.mxu0 %v91
    %367 = vmatprep.subr.mxu0 0.0
    %368 = vmatpush1.msra.mxu0 %v94
    %369 = vmatprep.subr.mxu0 0.0
    %370 = vmatpush1.msra.mxu0 %v97
    %371 = vmatprep.subr.mxu0 0.0
    %372 = vmatpush1.msra.mxu0 %v100
    %373 = vmatprep.subr.mxu0 0.0
    %374 = vmatpush1.msra.mxu0 %v103
    %375 = vmatprep.subr.mxu0 0.0
    %376 = vmatpush1.msra.mxu0 %v106
    %377 = vmatprep.subr.mxu0 0.0
    %378 = vmatpush1.msra.mxu0 0.0
    %379 = vmatprep.subr.mxu0 0.0
    %380 = vmatpush1.msra.mxu0 0.0
    %381 = vmatprep.subr.mxu0 0.0
    %382 = vmatpush1.msra.mxu0 0.0
    %383 = vmatprep.subr.mxu0 0.0
    %384 = vmatpush1.msra.mxu0 0.0
    %385 = vmatprep.subr.mxu0 0.0
    %386 = vmatpush1.msra.mxu0 0.0
    %387 = vmatprep.subr.mxu0 0.0
    %388 = vmatpush1.msra.mxu0 0.0
    %389 = vmatprep.subr.mxu0 0.0
    %390 = vmatpush1.msra.mxu0 0.0
    %391 = vmatprep.subr.mxu0 0.0
    %392 = vmatpush1.msra.mxu0 0.0
    %393 = vmatprep.subr.mxu0 0.0
    %394 = vmatpush1.msra.mxu0 0.0
    %395 = vmatprep.subr.mxu0 0.0
    %396 = vmatpush1.msra.mxu0 0.0
    %397 = vmatprep.subr.mxu0 0.0
    %398 = vmatpush1.msra.mxu0 0.0
    %399 = vmatprep.subr.mxu0 0.0
    %400 = vmatpush1.msra.mxu0 0.0
    %401 = vmatprep.subr.mxu0 0.0
    %402 = vmatpush1.msra.mxu0 0.0
    %403 = vmatprep.subr.mxu0 0.0
    %404 = vmatpush1.msra.mxu0 0.0
    %405 = vmatprep.subr.mxu0 0.0
    %406 = vmatpush1.msra.mxu0 0.0
    %407 = vmatprep.subr.mxu0 0.0
    %408 = vmatpush1.msra.mxu0 0.0
    %409 = vmatprep.mubr.f32.mxu0 0.0
    %410 = vmatmul.mubr.f32.gmra.mrb[0].mxu0 %v269
    %v411 = vpop.f32.mrb[0].mxu0
    %v412 = vadd.f32 0.0, %v411
    %v413 = vpop.f32.mrb[0].mxu0
    %414 = vdwg.mxu0
    %v415 = vadd.f32 %v271, %v341
    %v416 = vxor.u32 %v415, 2147483648
    %v417 = vmul.f32 %v416, 1.442695
    %v418 = vpow.pop %v417
    %v419 = vadd.f32 %v418, 1.0
    %v420 = vrcp.pop %v419
    %v421 = vmul.f32 1.0, %v420
    %v422 = vadd.f32 %v272, %v343
    %v423 = vxor.u32 %v422, 2147483648
    %v424 = vmul.f32 %v423, 1.442695
    %v425 = vpow.pop %v424
    %v426 = vadd.f32 %v425, 1.0
    %v427 = vrcp.pop %v426
    %v428 = vmul.f32 1.0, %v427
    %v429 = vadd.f32 %v412, %v53
    %v430 = vmul.f32 %v421, %v429
    %v431 = vadd.f32 %v273, %v430
    %v432 = vtanh.pop %v431
    %v433 = vsub.f32 1.0, %v428
    %v434 = vmul.f32 %v433, %v432
    %v435 = vmul.f32 %v428, %v269
    %v436 = vadd.f32 %v434, %v435
    %s437 = scalar_lea.vmem [#allocation2], 48
    %v438 = vld [vmem:[%s437] sm:$0xff]
    %v439 = vld [vmem:[%s437 + $0x8] sm:$0xff]
    %v440 = vld [vmem:[%s437 + $0x10] sm:$0xff]
    %441 = vmatprep.subr.mxu0 %v60
    %442 = vmatpush1.msra.mxu0 %v59
    %443 = vmatprep.subr.mxu0 %v63
    %444 = vmatpush1.msra.mxu0 %v62
    %445 = vmatprep.subr.mxu0 %v66
    %446 = vmatpush1.msra.mxu0 %v65
    %447 = vmatprep.subr.mxu0 %v69
    %448 = vmatpush1.msra.mxu0 %v68
    %449 = vmatprep.subr.mxu0 %v72
    %450 = vmatpush1.msra.mxu0 %v71
    %451 = vmatprep.subr.mxu0 %v75
    %452 = vmatpush1.msra.mxu0 %v74
    %453 = vmatprep.subr.mxu0 %v78
    %454 = vmatpush1.msra.mxu0 %v77
    %455 = vmatprep.subr.mxu0 %v81
    %456 = vmatpush1.msra.mxu0 %v80
    %457 = vmatprep.subr.mxu0 %v84
    %458 = vmatpush1.msra.mxu0 %v83
    %459 = vmatprep.subr.mxu0 %v87
    %460 = vmatpush1.msra.mxu0 %v86
    %461 = vmatprep.subr.mxu0 %v90
    %462 = vmatpush1.msra.mxu0 %v89
    %463 = vmatprep.subr.mxu0 %v93
    %464 = vmatpush1.msra.mxu0 %v92
    %465 = vmatprep.subr.mxu0 %v96
    %466 = vmatpush1.msra.mxu0 %v95
    %467 = vmatprep.subr.mxu0 %v99
    %468 = vmatpush1.msra.mxu0 %v98
    %469 = vmatprep.subr.mxu0 %v102
    %470 = vmatpush1.msra.mxu0 %v101
    %471 = vmatprep.subr.mxu0 %v105
    %472 = vmatpush1.msra.mxu0 %v104
    %473 = vmatprep.subr.mxu0 0.0
    %474 = vmatpush1.msra.mxu0 0.0
    %475 = vmatprep.subr.mxu0 0.0
    %476 = vmatpush1.msra.mxu0 0.0
    %477 = vmatprep.subr.mxu0 0.0
    %478 = vmatpush1.msra.mxu0 0.0
    %479 = vmatprep.subr.mxu0 0.0
    %480 = vmatpush1.msra.mxu0 0.0
    %481 = vmatprep.subr.mxu0 0.0
    %482 = vmatpush1.msra.mxu0 0.0
    %483 = vmatprep.subr.mxu0 0.0
    %484 = vmatpush1.msra.mxu0 0.0
    %485 = vmatprep.subr.mxu0 0.0
    %486 = vmatpush1.msra.mxu0 0.0
    %487 = vmatprep.subr.mxu0 0.0
    %488 = vmatpush1.msra.mxu0 0.0
    %489 = vmatprep.subr.mxu0 0.0
    %490 = vmatpush1.msra.mxu0 0.0
    %491 = vmatprep.subr.mxu0 0.0
    %492 = vmatpush1.msra.mxu0 0.0
    %493 = vmatprep.subr.mxu0 0.0
    %494 = vmatpush1.msra.mxu0 0.0
    %495 = vmatprep.subr.mxu0 0.0
    %496 = vmatpush1.msra.mxu0 0.0
    %497 = vmatprep.subr.mxu0 0.0
    %498 = vmatpush1.msra.mxu0 0.0
    %499 = vmatprep.subr.mxu0 0.0
    %500 = vmatpush1.msra.mxu0 0.0
    %501 = vmatprep.subr.mxu0 0.0
    %502 = vmatpush1.msra.mxu0 0.0
    %503 = vmatprep.subr.mxu0 0.0
    %504 = vmatpush1.msra.mxu0 0.0
    %505 = vmatprep.mubr.f32.mxu0 0.0
    %506 = vmatmul.mubr.f32.gmra.mrb[0].mxu0 %v436
    %v507 = vpop.f32.mrb[0].mxu0
    %v508 = vadd.f32 0.0, %v507
    %v509 = vpop.f32.mrb[0].mxu0
    %v510 = vadd.f32 0.0, %v509
    %511 = vdwg.mxu0
    %512 = vmatprep.subr.mxu0 0.0
    %513 = vmatpush1.msra.mxu0 %v61
    %514 = vmatprep.subr.mxu0 0.0
    %515 = vmatpush1.msra.mxu0 %v64
    %516 = vmatprep.subr.mxu0 0.0
    %517 = vmatpush1.msra.mxu0 %v67
    %518 = vmatprep.subr.mxu0 0.0
    %519 = vmatpush1.msra.mxu0 %v70
    %520 = vmatprep.subr.mxu0 0.0
    %521 = vmatpush1.msra.mxu0 %v73
    %522 = vmatprep.subr.mxu0 0.0
    %523 = vmatpush1.msra.mxu0 %v76
    %524 = vmatprep.subr.mxu0 0.0
    %525 = vmatpush1.msra.mxu0 %v79
    %526 = vmatprep.subr.mxu0 0.0
    %527 = vmatpush1.msra.mxu0 %v82
    %528 = vmatprep.subr.mxu0 0.0
    %529 = vmatpush1.msra.mxu0 %v85
    %530 = vmatprep.subr.mxu0 0.0
    %531 = vmatpush1.msra.mxu0 %v88
    %532 = vmatprep.subr.mxu0 0.0
    %533 = vmatpush1.msra.mxu0 %v91
    %534 = vmatprep.subr.mxu0 0.0
    %535 = vmatpush1.msra.mxu0 %v94
    %536 = vmatprep.subr.mxu0 0.0
    %537 = vmatpush1.msra.mxu0 %v97
    %538 = vmatprep.subr.mxu0 0.0
    %539 = vmatpush1.msra.mxu0 %v100
    %540 = vmatprep.subr.mxu0 0.0
    %541 = vmatpush1.msra.mxu0 %v103
    %542 = vmatprep.subr.mxu0 0.0
    %543 = vmatpush1.msra.mxu0 %v106
    %544 = vmatprep.subr.mxu0 0.0
    %545 = vmatpush1.msra.mxu0 0.0
    %546 = vmatprep.subr.mxu0 0.0
    %547 = vmatpush1.msra.mxu0 0.0
    %548 = vmatprep.subr.mxu0 0.0
    %549 = vmatpush1.msra.mxu0 0.0
    %550 = vmatprep.subr.mxu0 0.0
    %551 = vmatpush1.msra.mxu0 0.0
    %552 = vmatprep.subr.mxu0 0.0
    %553 = vmatpush1.msra.mxu0 0.0
    %554 = vmatprep.subr.mxu0 0.0
    %555 = vmatpush1.msra.mxu0 0.0
    %556 = vmatprep.subr.mxu0 0.0
    %557 = vmatpush1.msra.mxu0 0.0
    %558 = vmatprep.subr.mxu0 0.0
    %559 = vmatpush1.msra.mxu0 0.0
    %560 = vmatprep.subr.mxu0 0.0
    %561 = vmatpush1.msra.mxu0 0.0
    %562 = vmatprep.subr.mxu0 0.0
    %563 = vmatpush1.msra.mxu0 0.0
    %564 = vmatprep.subr.mxu0 0.0
    %565 = vmatpush1.msra.mxu0 0.0
    %566 = vmatprep.subr.mxu0 0.0
    %567 = vmatpush1.msra.mxu0 0.0
    %568 = vmatprep.subr.mxu0 0.0
    %569 = vmatpush1.msra.mxu0 0.0
    %570 = vmatprep.subr.mxu0 0.0
    %571 = vmatpush1.msra.mxu0 0.0
    %572 = vmatprep.subr.mxu0 0.0
    %573 = vmatpush1.msra.mxu0 0.0
    %574 = vmatprep.subr.mxu0 0.0
    %575 = vmatpush1.msra.mxu0 0.0
    %576 = vmatprep.mubr.f32.mxu0 0.0
    %577 = vmatmul.mubr.f32.gmra.mrb[0].mxu0 %v436
    %v578 = vpop.f32.mrb[0].mxu0
    %v579 = vadd.f32 0.0, %v578
    %v580 = vpop.f32.mrb[0].mxu0
    %581 = vdwg.mxu0
    %v582 = vadd.f32 %v438, %v508
    %v583 = vxor.u32 %v582, 2147483648
    %v584 = vmul.f32 %v583, 1.442695
    %v585 = vpow.pop %v584
    %v586 = vadd.f32 %v585, 1.0
    %v587 = vrcp.pop %v586
    %v588 = vmul.f32 1.0, %v587
    %v589 = vadd.f32 %v439, %v510
    %v590 = vxor.u32 %v589, 2147483648
    %v591 = vmul.f32 %v590, 1.442695
    %v592 = vpow.pop %v591
    %v593 = vadd.f32 %v592, 1.0
    %v594 = vrcp.pop %v593
    %v595 = vmul.f32 1.0, %v594
    %v596 = vadd.f32 %v579, %v53
    %v597 = vmul.f32 %v588, %v596
    %v598 = vadd.f32 %v440, %v597
    %v599 = vtanh.pop %v598
    %v600 = vsub.f32 1.0, %v595
    %v601 = vmul.f32 %v600, %v599
    %v602 = vmul.f32 %v595, %v436
    %v603 = vadd.f32 %v601, %v602
    %s604 = scalar_lea.vmem [#allocation2], 72
    %v605 = vld [vmem:[%s604] sm:$0xff]
    %v606 = vld [vmem:[%s604 + $0x8] sm:$0xff]
    %v607 = vld [vmem:[%s604 + $0x10] sm:$0xff]
    %608 = vmatprep.subr.mxu0 %v60
    %609 = vmatpush1.msra.mxu0 %v59
    %610 = vmatprep.subr.mxu0 %v63
    %611 = vmatpush1.msra.mxu0 %v62
    %612 = vmatprep.subr.mxu0 %v66
    %613 = vmatpush1.msra.mxu0 %v65
    %614 = vmatprep.subr.mxu0 %v69
    %615 = vmatpush1.msra.mxu0 %v68
    %616 = vmatprep.subr.mxu0 %v72
    %617 = vmatpush1.msra.mxu0 %v71
    %618 = vmatprep.subr.mxu0 %v75
    %619 = vmatpush1.msra.mxu0 %v74
    %620 = vmatprep.subr.mxu0 %v78
    %621 = vmatpush1.msra.mxu0 %v77
    %622 = vmatprep.subr.mxu0 %v81
    %623 = vmatpush1.msra.mxu0 %v80
    %624 = vmatprep.subr.mxu0 %v84
    %625 = vmatpush1.msra.mxu0 %v83
    %626 = vmatprep.subr.mxu0 %v87
    %627 = vmatpush1.msra.mxu0 %v86
    %628 = vmatprep.subr.mxu0 %v90
    %629 = vmatpush1.msra.mxu0 %v89
    %630 = vmatprep.subr.mxu0 %v93
    %631 = vmatpush1.msra.mxu0 %v92
    %632 = vmatprep.subr.mxu0 %v96
    %633 = vmatpush1.msra.mxu0 %v95
    %634 = vmatprep.subr.mxu0 %v99
    %635 = vmatpush1.msra.mxu0 %v98
    %636 = vmatprep.subr.mxu0 %v102
    %637 = vmatpush1.msra.mxu0 %v101
    %638 = vmatprep.subr.mxu0 %v105
    %639 = vmatpush1.msra.mxu0 %v104
    %640 = vmatprep.subr.mxu0 0.0
    %641 = vmatpush1.msra.mxu0 0.0
    %642 = vmatprep.subr.mxu0 0.0
    %643 = vmatpush1.msra.mxu0 0.0
    %644 = vmatprep.subr.mxu0 0.0
    %645 = vmatpush1.msra.mxu0 0.0
    %646 = vmatprep.subr.mxu0 0.0
    %647 = vmatpush1.msra.mxu0 0.0
    %648 = vmatprep.subr.mxu0 0.0
    %649 = vmatpush1.msra.mxu0 0.0
    %650 = vmatprep.subr.mxu0 0.0
    %651 = vmatpush1.msra.mxu0 0.0
    %652 = vmatprep.subr.mxu0 0.0
    %653 = vmatpush1.msra.mxu0 0.0
    %654 = vmatprep.subr.mxu0 0.0
    %655 = vmatpush1.msra.mxu0 0.0
    %656 = vmatprep.subr.mxu0 0.0
    %657 = vmatpush1.msra.mxu0 0.0
    %658 = vmatprep.subr.mxu0 0.0
    %659 = vmatpush1.msra.mxu0 0.0
    %660 = vmatprep.subr.mxu0 0.0
    %661 = vmatpush1.msra.mxu0 0.0
    %662 = vmatprep.subr.mxu0 0.0
    %663 = vmatpush1.msra.mxu0 0.0
    %664 = vmatprep.subr.mxu0 0.0
    %665 = vmatpush1.msra.mxu0 0.0
    %666 = vmatprep.subr.mxu0 0.0
    %667 = vmatpush1.msra.mxu0 0.0
    %668 = vmatprep.subr.mxu0 0.0
    %669 = vmatpush1.msra.mxu0 0.0
    %670 = vmatprep.subr.mxu0 0.0
    %671 = vmatpush1.msra.mxu0 0.0
    %672 = vmatprep.mubr.f32.mxu0 0.0
    %673 = vmatmul.mubr.f32.gmra.mrb[0].mxu0 %v603
    %v674 = vpop.f32.mrb[0].mxu0
    %v675 = vadd.f32 0.0, %v674
    %v676 = vpop.f32.mrb[0].mxu0
    %v677 = vadd.f32 0.0, %v676
    %678 = vdwg.mxu0
    %679 = vmatprep.subr.mxu0 0.0
    %680 = vmatpush1.msra.mxu0 %v61
    %681 = vmatprep.subr.mxu0 0.0
    %682 = vmatpush1.msra.mxu0 %v64
    %683 = vmatprep.subr.mxu0 0.0
    %684 = vmatpush1.msra.mxu0 %v67
    %685 = vmatprep.subr.mxu0 0.0
    %686 = vmatpush1.msra.mxu0 %v70
    %687 = vmatprep.subr.mxu0 0.0
    %688 = vmatpush1.msra.mxu0 %v73
    %689 = vmatprep.subr.mxu0 0.0
    %690 = vmatpush1.msra.mxu0 %v76
    %691 = vmatprep.subr.mxu0 0.0
    %692 = vmatpush1.msra.mxu0 %v79
    %693 = vmatprep.subr.mxu0 0.0
    %694 = vmatpush1.msra.mxu0 %v82
    %695 = vmatprep.subr.mxu0 0.0
    %696 = vmatpush1.msra.mxu0 %v85
    %697 = vmatprep.subr.mxu0 0.0
    %698 = vmatpush1.msra.mxu0 %v88
    %699 = vmatprep.subr.mxu0 0.0
    %700 = vmatpush1.msra.mxu0 %v91
    %701 = vmatprep.subr.mxu0 0.0
    %702 = vmatpush1.msra.mxu0 %v94
    %703 = vmatprep.subr.mxu0 0.0
    %704 = vmatpush1.msra.mxu0 %v97
    %705 = vmatprep.subr.mxu0 0.0
    %706 = vmatpush1.msra.mxu0 %v100
    %707 = vmatprep.subr.mxu0 0.0
    %708 = vmatpush1.msra.mxu0 %v103
    %709 = vmatprep.subr.mxu0 0.0
    %710 = vmatpush1.msra.mxu0 %v106
    %711 = vmatprep.subr.mxu0 0.0
    %712 = vmatpush1.msra.mxu0 0.0
    %713 = vmatprep.subr.mxu0 0.0
    %714 = vmatpush1.msra.mxu0 0.0
    %715 = vmatprep.subr.mxu0 0.0
    %716 = vmatpush1.msra.mxu0 0.0
    %717 = vmatprep.subr.mxu0 0.0
    %718 = vmatpush1.msra.mxu0 0.0
    %719 = vmatprep.subr.mxu0 0.0
    %720 = vmatpush1.msra.mxu0 0.0
    %721 = vmatprep.subr.mxu0 0.0
    %722 = vmatpush1.msra.mxu0 0.0
    %723 = vmatprep.subr.mxu0 0.0
    %724 = vmatpush1.msra.mxu0 0.0
    %725 = vmatprep.subr.mxu0 0.0
    %726 = vmatpush1.msra.mxu0 0.0
    %727 = vmatprep.subr.mxu0 0.0
    %728 = vmatpush1.msra.mxu0 0.0
    %729 = vmatprep.subr.mxu0 0.0
    %730 = vmatpush1.msra.mxu0 0.0
    %731 = vmatprep.subr.mxu0 0.0
    %732 = vmatpush1.msra.mxu0 0.0
    %733 = vmatprep.subr.mxu0 0.0
    %734 = vmatpush1.msra.mxu0 0.0
    %735 = vmatprep.subr.mxu0 0.0
    %736 = vmatpush1.msra.mxu0 0.0
    %737 = vmatprep.subr.mxu0 0.0
    %738 = vmatpush1.msra.mxu0 0.0
    %739 = vmatprep.subr.mxu0 0.0
    %740 = vmatpush1.msra.mxu0 0.0
    %741 = vmatprep.subr.mxu0 0.0
    %742 = vmatpush1.msra.mxu0 0.0
    %743 = vmatprep.mubr.f32.mxu0 0.0
    %744 = vmatmul.mubr.f32.gmra.mrb[0].mxu0 %v603
    %v745 = vpop.f32.mrb[0].mxu0
    %v746 = vadd.f32 0.0, %v745
    %v747 = vpop.f32.mrb[0].mxu0
    %748 = vdwg.mxu0
    %v749 = vadd.f32 %v605, %v675
    %v750 = vxor.u32 %v749, 2147483648
    %v751 = vmul.f32 %v750, 1.442695
    %v752 = vpow.pop %v751
    %v753 = vadd.f32 %v752, 1.0
    %v754 = vrcp.pop %v753
    %v755 = vmul.f32 1.0, %v754
    %v756 = vadd.f32 %v606, %v677
    %v757 = vxor.u32 %v756, 2147483648
    %v758 = vmul.f32 %v757, 1.442695
    %v759 = vpow.pop %v758
    %v760 = vadd.f32 %v759, 1.0
    %v761 = vrcp.pop %v760
    %v762 = vmul.f32 1.0, %v761
    %v763 = vadd.f32 %v746, %v53
    %v764 = vmul.f32 %v755, %v763
    %v765 = vadd.f32 %v607, %v764
    %v766 = vtanh.pop %v765
    %v767 = vsub.f32 1.0, %v762
    %v768 = vmul.f32 %v767, %v766
    %v769 = vmul.f32 %v762, %v603
    %v770 = vadd.f32 %v768, %v769
    %s771 = scalar_lea.vmem [#allocation2], 96
    %v772 = vld [vmem:[%s771] sm:$0xff]
    %v773 = vld [vmem:[%s771 + $0x8] sm:$0xff]
    %v774 = vld [vmem:[%s771 + $0x10] sm:$0xff]
    %775 = vmatprep.subr.mxu0 %v60
    %776 = vmatpush1.msra.mxu0 %v59
    %777 = vmatprep.subr.mxu0 %v63
    %778 = vmatpush1.msra.mxu0 %v62
    %779 = vmatprep.subr.mxu0 %v66
    %780 = vmatpush1.msra.mxu0 %v65
    %781 = vmatprep.subr.mxu0 %v69
    %782 = vmatpush1.msra.mxu0 %v68
    %783 = vmatprep.subr.mxu0 %v72
    %784 = vmatpush1.msra.mxu0 %v71
    %785 = vmatprep.subr.mxu0 %v75
    %786 = vmatpush1.msra.mxu0 %v74
    %787 = vmatprep.subr.mxu0 %v78
    %788 = vmatpush1.msra.mxu0 %v77
    %789 = vmatprep.subr.mxu0 %v81
    %790 = vmatpush1.msra.mxu0 %v80
    %791 = vmatprep.subr.mxu0 %v84
    %792 = vmatpush1.msra.mxu0 %v83
    %793 = vmatprep.subr.mxu0 %v87
    %794 = vmatpush1.msra.mxu0 %v86
    %795 = vmatprep.subr.mxu0 %v90
    %796 = vmatpush1.msra.mxu0 %v89
    %797 = vmatprep.subr.mxu0 %v93
    %798 = vmatpush1.msra.mxu0 %v92
    %799 = vmatprep.subr.mxu0 %v96
    %800 = vmatpush1.msra.mxu0 %v95
    %801 = vmatprep.subr.mxu0 %v99
    %802 = vmatpush1.msra.mxu0 %v98
    %803 = vmatprep.subr.mxu0 %v102
    %804 = vmatpush1.msra.mxu0 %v101
    %805 = vmatprep.subr.mxu0 %v105
    %806 = vmatpush1.msra.mxu0 %v104
    %807 = vmatprep.subr.mxu0 0.0
    %808 = vmatpush1.msra.mxu0 0.0
    %809 = vmatprep.subr.mxu0 0.0
    %810 = vmatpush1.msra.mxu0 0.0
    %811 = vmatprep.subr.mxu0 0.0
    %812 = vmatpush1.msra.mxu0 0.0
    %813 = vmatprep.subr.mxu0 0.0
    %814 = vmatpush1.msra.mxu0 0.0
    %815 = vmatprep.subr.mxu0 0.0
    %816 = vmatpush1.msra.mxu0 0.0
    %817 = vmatprep.subr.mxu0 0.0
    %818 = vmatpush1.msra.mxu0 0.0
    %819 = vmatprep.subr.mxu0 0.0
    %820 = vmatpush1.msra.mxu0 0.0
    %821 = vmatprep.subr.mxu0 0.0
    %822 = vmatpush1.msra.mxu0 0.0
    %823 = vmatprep.subr.mxu0 0.0
    %824 = vmatpush1.msra.mxu0 0.0
    %825 = vmatprep.subr.mxu0 0.0
    %826 = vmatpush1.msra.mxu0 0.0
    %827 = vmatprep.subr.mxu0 0.0
    %828 = vmatpush1.msra.mxu0 0.0
    %829 = vmatprep.subr.mxu0 0.0
    %830 = vmatpush1.msra.mxu0 0.0
    %831 = vmatprep.subr.mxu0 0.0
    %832 = vmatpush1.msra.mxu0 0.0
    %833 = vmatprep.subr.mxu0 0.0
    %834 = vmatpush1.msra.mxu0 0.0
    %835 = vmatprep.subr.mxu0 0.0
    %836 = vmatpush1.msra.mxu0 0.0
    %837 = vmatprep.subr.mxu0 0.0
    %838 = vmatpush1.msra.mxu0 0.0
    %839 = vmatprep.mubr.f32.mxu0 0.0
    %840 = vmatmul.mubr.f32.gmra.mrb[0].mxu0 %v770
    %v841 = vpop.f32.mrb[0].mxu0
    %v842 = vadd.f32 0.0, %v841
    %v843 = vpop.f32.mrb[0].mxu0
    %v844 = vadd.f32 0.0, %v843
    %845 = vdwg.mxu0
    %846 = vmatprep.subr.mxu0 0.0
    %847 = vmatpush1.msra.mxu0 %v61
    %848 = vmatprep.subr.mxu0 0.0
    %849 = vmatpush1.msra.mxu0 %v64
    %850 = vmatprep.subr.mxu0 0.0
    %851 = vmatpush1.msra.mxu0 %v67
    %852 = vmatprep.subr.mxu0 0.0
    %853 = vmatpush1.msra.mxu0 %v70
    %854 = vmatprep.subr.mxu0 0.0
    %855 = vmatpush1.msra.mxu0 %v73
    %856 = vmatprep.subr.mxu0 0.0
    %857 = vmatpush1.msra.mxu0 %v76
    %858 = vmatprep.subr.mxu0 0.0
    %859 = vmatpush1.msra.mxu0 %v79
    %860 = vmatprep.subr.mxu0 0.0
    %861 = vmatpush1.msra.mxu0 %v82
    %862 = vmatprep.subr.mxu0 0.0
    %863 = vmatpush1.msra.mxu0 %v85
    %864 = vmatprep.subr.mxu0 0.0
    %865 = vmatpush1.msra.mxu0 %v88
    %866 = vmatprep.subr.mxu0 0.0
    %867 = vmatpush1.msra.mxu0 %v91
    %868 = vmatprep.subr.mxu0 0.0
    %869 = vmatpush1.msra.mxu0 %v94
    %870 = vmatprep.subr.mxu0 0.0
    %871 = vmatpush1.msra.mxu0 %v97
    %872 = vmatprep.subr.mxu0 0.0
    %873 = vmatpush1.msra.mxu0 %v100
    %874 = vmatprep.subr.mxu0 0.0
    %875 = vmatpush1.msra.mxu0 %v103
    %876 = vmatprep.subr.mxu0 0.0
    %877 = vmatpush1.msra.mxu0 %v106
    %878 = vmatprep.subr.mxu0 0.0
    %879 = vmatpush1.msra.mxu0 0.0
    %880 = vmatprep.subr.mxu0 0.0
    %881 = vmatpush1.msra.mxu0 0.0
    %882 = vmatprep.subr.mxu0 0.0
    %883 = vmatpush1.msra.mxu0 0.0
    %884 = vmatprep.subr.mxu0 0.0
    %885 = vmatpush1.msra.mxu0 0.0
    %886 = vmatprep.subr.mxu0 0.0
    %887 = vmatpush1.msra.mxu0 0.0
    %888 = vmatprep.subr.mxu0 0.0
    %889 = vmatpush1.msra.mxu0 0.0
    %890 = vmatprep.subr.mxu0 0.0
    %891 = vmatpush1.msra.mxu0 0.0
    %892 = vmatprep.subr.mxu0 0.0
    %893 = vmatpush1.msra.mxu0 0.0
    %894 = vmatprep.subr.mxu0 0.0
    %895 = vmatpush1.msra.mxu0 0.0
    %896 = vmatprep.subr.mxu0 0.0
    %897 = vmatpush1.msra.mxu0 0.0
    %898 = vmatprep.subr.mxu0 0.0
    %899 = vmatpush1.msra.mxu0 0.0
    %900 = vmatprep.subr.mxu0 0.0
    %901 = vmatpush1.msra.mxu0 0.0
    %902 = vmatprep.subr.mxu0 0.0
    %903 = vmatpush1.msra.mxu0 0.0
    %904 = vmatprep.subr.mxu0 0.0
    %905 = vmatpush1.msra.mxu0 0.0
    %906 = vmatprep.subr.mxu0 0.0
    %907 = vmatpush1.msra.mxu0 0.0
    %908 = vmatprep.subr.mxu0 0.0
    %909 = vmatpush1.msra.mxu0 0.0
    %910 = vmatprep.mubr.f32.mxu0 0.0
    %911 = vmatmul.mubr.f32.gmra.mrb[0].mxu0 %v770
    %v912 = vpop.f32.mrb[0].mxu0
    %v913 = vadd.f32 0.0, %v912
    %v914 = vpop.f32.mrb[0].mxu0
    %915 = vdwg.mxu0
    %v916 = vadd.f32 %v772, %v842
    %v917 = vxor.u32 %v916, 2147483648
    %v918 = vmul.f32 %v917, 1.442695
    %v919 = vpow.pop %v918
    %v920 = vadd.f32 %v919, 1.0
    %v921 = vrcp.pop %v920
    %v922 = vmul.f32 1.0, %v921
    %v923 = vadd.f32 %v773, %v844
    %v924 = vxor.u32 %v923, 2147483648
    %v925 = vmul.f32 %v924, 1.442695
    %v926 = vpow.pop %v925
    %v927 = vadd.f32 %v926, 1.0
    %v928 = vrcp.pop %v927
    %v929 = vmul.f32 1.0, %v928
    %v930 = vadd.f32 %v913, %v53
    %v931 = vmul.f32 %v922, %v930
    %v932 = vadd.f32 %v774, %v931
    %v933 = vtanh.pop %v932
    %v934 = vsub.f32 1.0, %v929
    %v935 = vmul.f32 %v934, %v933
    %v936 = vmul.f32 %v929, %v770
    %v937 = vadd.f32 %v935, %v936
    %s938 = scalar_lea.vmem [#allocation2], 120
    %v939 = vld [vmem:[%s938] sm:$0xff]
    %v940 = vld [vmem:[%s938 + $0x8] sm:$0xff]
    %v941 = vld [vmem:[%s938 + $0x10] sm:$0xff]
    %942 = vmatprep.subr.mxu0 %v60
    %943 = vmatpush1.msra.mxu0 %v59
    %944 = vmatprep.subr.mxu0 %v63
    %945 = vmatpush1.msra.mxu0 %v62
    %946 = vmatprep.subr.mxu0 %v66
    %947 = vmatpush1.msra.mxu0 %v65
    %948 = vmatprep.subr.mxu0 %v69
    %949 = vmatpush1.msra.mxu0 %v68
    %950 = vmatprep.subr.mxu0 %v72
    %951 = vmatpush1.msra.mxu0 %v71
    %952 = vmatprep.subr.mxu0 %v75
    %953 = vmatpush1.msra.mxu0 %v74
    %954 = vmatprep.subr.mxu0 %v78
    %955 = vmatpush1.msra.mxu0 %v77
    %956 = vmatprep.subr.mxu0 %v81
    %957 = vmatpush1.msra.mxu0 %v80
    %958 = vmatprep.subr.mxu0 %v84
    %959 = vmatpush1.msra.mxu0 %v83
    %960 = vmatprep.subr.mxu0 %v87
    %961 = vmatpush1.msra.mxu0 %v86
    %962 = vmatprep.subr.mxu0 %v90
    %963 = vmatpush1.msra.mxu0 %v89
    %964 = vmatprep.subr.mxu0 %v93
    %965 = vmatpush1.msra.mxu0 %v92
    %966 = vmatprep.subr.mxu0 %v96
    %967 = vmatpush1.msra.mxu0 %v95
    %968 = vmatprep.subr.mxu0 %v99
    %969 = vmatpush1.msra.mxu0 %v98
    %970 = vmatprep.subr.mxu0 %v102
    %971 = vmatpush1.msra.mxu0 %v101
    %972 = vmatprep.subr.mxu0 %v105
    %973 = vmatpush1.msra.mxu0 %v104
    %974 = vmatprep.subr.mxu0 0.0
    %975 = vmatpush1.msra.mxu0 0.0
    %976 = vmatprep.subr.mxu0 0.0
    %977 = vmatpush1.msra.mxu0 0.0
    %978 = vmatprep.subr.mxu0 0.0
    %979 = vmatpush1.msra.mxu0 0.0
    %980 = vmatprep.subr.mxu0 0.0
    %981 = vmatpush1.msra.mxu0 0.0
    %982 = vmatprep.subr.mxu0 0.0
    %983 = vmatpush1.msra.mxu0 0.0
    %984 = vmatprep.subr.mxu0 0.0
    %985 = vmatpush1.msra.mxu0 0.0
    %986 = vmatprep.subr.mxu0 0.0
    %987 = vmatpush1.msra.mxu0 0.0
    %988 = vmatprep.subr.mxu0 0.0
    %989 = vmatpush1.msra.mxu0 0.0
    %990 = vmatprep.subr.mxu0 0.0
    %991 = vmatpush1.msra.mxu0 0.0
    %992 = vmatprep.subr.mxu0 0.0
    %993 = vmatpush1.msra.mxu0 0.0
    %994 = vmatprep.subr.mxu0 0.0
    %995 = vmatpush1.msra.mxu0 0.0
    %996 = vmatprep.subr.mxu0 0.0
    %997 = vmatpush1.msra.mxu0 0.0
    %998 = vmatprep.subr.mxu0 0.0
    %999 = vmatpush1.msra.mxu0 0.0
    %1000 = vmatprep.subr.mxu0 0.0
    %1001 = vmatpush1.msra.mxu0 0.0
    %1002 = vmatprep.subr.mxu0 0.0
    %1003 = vmatpush1.msra.mxu0 0.0
    %1004 = vmatprep.subr.mxu0 0.0
    %1005 = vmatpush1.msra.mxu0 0.0
    %1006 = vmatprep.mubr.f32.mxu0 0.0
    %1007 = vmatmul.mubr.f32.gmra.mrb[0].mxu0 %v937
    %v1008 = vpop.f32.mrb[0].mxu0
    %v1009 = vadd.f32 0.0, %v1008
    %v1010 = vpop.f32.mrb[0].mxu0
    %v1011 = vadd.f32 0.0, %v1010
    %1012 = vdwg.mxu0
    %1013 = vmatprep.subr.mxu0 0.0
    %1014 = vmatpush1.msra.mxu0 %v61
    %1015 = vmatprep.subr.mxu0 0.0
    %1016 = vmatpush1.msra.mxu0 %v64
    %1017 = vmatprep.subr.mxu0 0.0
    %1018 = vmatpush1.msra.mxu0 %v67
    %1019 = vmatprep.subr.mxu0 0.0
    %1020 = vmatpush1.msra.mxu0 %v70
    %1021 = vmatprep.subr.mxu0 0.0
    %1022 = vmatpush1.msra.mxu0 %v73
    %1023 = vmatprep.subr.mxu0 0.0
    %1024 = vmatpush1.msra.mxu0 %v76
    %1025 = vmatprep.subr.mxu0 0.0
    %1026 = vmatpush1.msra.mxu0 %v79
    %1027 = vmatprep.subr.mxu0 0.0
    %1028 = vmatpush1.msra.mxu0 %v82
    %1029 = vmatprep.subr.mxu0 0.0
    %1030 = vmatpush1.msra.mxu0 %v85
    %1031 = vmatprep.subr.mxu0 0.0
    %1032 = vmatpush1.msra.mxu0 %v88
    %1033 = vmatprep.subr.mxu0 0.0
    %1034 = vmatpush1.msra.mxu0 %v91
    %1035 = vmatprep.subr.mxu0 0.0
    %1036 = vmatpush1.msra.mxu0 %v94
    %1037 = vmatprep.subr.mxu0 0.0
    %1038 = vmatpush1.msra.mxu0 %v97
    %1039 = vmatprep.subr.mxu0 0.0
    %1040 = vmatpush1.msra.mxu0 %v100
    %1041 = vmatprep.subr.mxu0 0.0
    %1042 = vmatpush1.msra.mxu0 %v103
    %1043 = vmatprep.subr.mxu0 0.0
    %1044 = vmatpush1.msra.mxu0 %v106
    %1045 = vmatprep.subr.mxu0 0.0
    %1046 = vmatpush1.msra.mxu0 0.0
    %1047 = vmatprep.subr.mxu0 0.0
    %1048 = vmatpush1.msra.mxu0 0.0
    %1049 = vmatprep.subr.mxu0 0.0
    %1050 = vmatpush1.msra.mxu0 0.0
    %1051 = vmatprep.subr.mxu0 0.0
    %1052 = vmatpush1.msra.mxu0 0.0
    %1053 = vmatprep.subr.mxu0 0.0
    %1054 = vmatpush1.msra.mxu0 0.0
    %1055 = vmatprep.subr.mxu0 0.0
    %1056 = vmatpush1.msra.mxu0 0.0
    %1057 = vmatprep.subr.mxu0 0.0
    %1058 = vmatpush1.msra.mxu0 0.0
    %1059 = vmatprep.subr.mxu0 0.0
    %1060 = vmatpush1.msra.mxu0 0.0
    %1061 = vmatprep.subr.mxu0 0.0
    %1062 = vmatpush1.msra.mxu0 0.0
    %1063 = vmatprep.subr.mxu0 0.0
    %1064 = vmatpush1.msra.mxu0 0.0
    %1065 = vmatprep.subr.mxu0 0.0
    %1066 = vmatpush1.msra.mxu0 0.0
    %1067 = vmatprep.subr.mxu0 0.0
    %1068 = vmatpush1.msra.mxu0 0.0
    %1069 = vmatprep.subr.mxu0 0.0
    %1070 = vmatpush1.msra.mxu0 0.0
    %1071 = vmatprep.subr.mxu0 0.0
    %1072 = vmatpush1.msra.mxu0 0.0
    %1073 = vmatprep.subr.mxu0 0.0
    %1074 = vmatpush1.msra.mxu0 0.0
    %1075 = vmatprep.subr.mxu0 0.0
    %1076 = vmatpush1.msra.mxu0 0.0
    %1077 = vmatprep.mubr.f32.mxu0 0.0
    %1078 = vmatmul.mubr.f32.gmra.mrb[0].mxu0 %v937
    %v1079 = vpop.f32.mrb[0].mxu0
    %v1080 = vadd.f32 0.0, %v1079
    %v1081 = vpop.f32.mrb[0].mxu0
    %1082 = vdwg.mxu0
    %v1083 = vadd.f32 %v939, %v1009
    %v1084 = vxor.u32 %v1083, 2147483648
    %v1085 = vmul.f32 %v1084, 1.442695
    %v1086 = vpow.pop %v1085
    %v1087 = vadd.f32 %v1086, 1.0
    %v1088 = vrcp.pop %v1087
    %v1089 = vmul.f32 1.0, %v1088
    %v1090 = vadd.f32 %v940, %v1011
    %v1091 = vxor.u32 %v1090, 2147483648
    %v1092 = vmul.f32 %v1091, 1.442695
    %v1093 = vpow.pop %v1092
    %v1094 = vadd.f32 %v1093, 1.0
    %v1095 = vrcp.pop %v1094
    %v1096 = vmul.f32 1.0, %v1095
    %v1097 = vadd.f32 %v1080, %v53
    %v1098 = vmul.f32 %v1089, %v1097
    %v1099 = vadd.f32 %v941, %v1098
    %v1100 = vtanh.pop %v1099
    %v1101 = vsub.f32 1.0, %v1096
    %v1102 = vmul.f32 %v1101, %v1100
    %v1103 = vmul.f32 %v1096, %v937
    %v1104 = vadd.f32 %v1102, %v1103
    %s1105 = scalar_lea.vmem [#allocation2], 144
    %v1106 = vld [vmem:[%s1105] sm:$0xff]
    %v1107 = vld [vmem:[%s1105 + $0x8] sm:$0xff]
    %v1108 = vld [vmem:[%s1105 + $0x10] sm:$0xff]
    %1109 = vmatprep.subr.mxu0 %v60
    %1110 = vmatpush1.msra.mxu0 %v59
    %1111 = vmatprep.subr.mxu0 %v63
    %1112 = vmatpush1.msra.mxu0 %v62
    %1113 = vmatprep.subr.mxu0 %v66
    %1114 = vmatpush1.msra.mxu0 %v65
    %1115 = vmatprep.subr.mxu0 %v69
    %1116 = vmatpush1.msra.mxu0 %v68
    %1117 = vmatprep.subr.mxu0 %v72
    %1118 = vmatpush1.msra.mxu0 %v71
    %1119 = vmatprep.subr.mxu0 %v75
    %1120 = vmatpush1.msra.mxu0 %v74
    %1121 = vmatprep.subr.mxu0 %v78
    %1122 = vmatpush1.msra.mxu0 %v77
    %1123 = vmatprep.subr.mxu0 %v81
    %1124 = vmatpush1.msra.mxu0 %v80
    %1125 = vmatprep.subr.mxu0 %v84
    %1126 = vmatpush1.msra.mxu0 %v83
    %1127 = vmatprep.subr.mxu0 %v87
    %1128 = vmatpush1.msra.mxu0 %v86
    %1129 = vmatprep.subr.mxu0 %v90
    %1130 = vmatpush1.msra.mxu0 %v89
    %1131 = vmatprep.subr.mxu0 %v93
    %1132 = vmatpush1.msra.mxu0 %v92
    %1133 = vmatprep.subr.mxu0 %v96
    %1134 = vmatpush1.msra.mxu0 %v95
    %1135 = vmatprep.subr.mxu0 %v99
    %1136 = vmatpush1.msra.mxu0 %v98
    %1137 = vmatprep.subr.mxu0 %v102
    %1138 = vmatpush1.msra.mxu0 %v101
    %1139 = vmatprep.subr.mxu0 %v105
    %1140 = vmatpush1.msra.mxu0 %v104
    %1141 = vmatprep.subr.mxu0 0.0
    %1142 = vmatpush1.msra.mxu0 0.0
    %1143 = vmatprep.subr.mxu0 0.0
    %1144 = vmatpush1.msra.mxu0 0.0
    %1145 = vmatprep.subr.mxu0 0.0
    %1146 = vmatpush1.msra.mxu0 0.0
    %1147 = vmatprep.subr.mxu0 0.0
    %1148 = vmatpush1.msra.mxu0 0.0
    %1149 = vmatprep.subr.mxu0 0.0
    %1150 = vmatpush1.msra.mxu0 0.0
    %1151 = vmatprep.subr.mxu0 0.0
    %1152 = vmatpush1.msra.mxu0 0.0
    %1153 = vmatprep.subr.mxu0 0.0
    %1154 = vmatpush1.msra.mxu0 0.0
    %1155 = vmatprep.subr.mxu0 0.0
    %1156 = vmatpush1.msra.mxu0 0.0
    %1157 = vmatprep.subr.mxu0 0.0
    %1158 = vmatpush1.msra.mxu0 0.0
    %1159 = vmatprep.subr.mxu0 0.0
    %1160 = vmatpush1.msra.mxu0 0.0
    %1161 = vmatprep.subr.mxu0 0.0
    %1162 = vmatpush1.msra.mxu0 0.0
    %1163 = vmatprep.subr.mxu0 0.0
    %1164 = vmatpush1.msra.mxu0 0.0
    %1165 = vmatprep.subr.mxu0 0.0
    %1166 = vmatpush1.msra.mxu0 0.0
    %1167 = vmatprep.subr.mxu0 0.0
    %1168 = vmatpush1.msra.mxu0 0.0
    %1169 = vmatprep.subr.mxu0 0.0
    %1170 = vmatpush1.msra.mxu0 0.0
    %1171 = vmatprep.subr.mxu0 0.0
    %1172 = vmatpush1.msra.mxu0 0.0
    %1173 = vmatprep.mubr.f32.mxu0 0.0
    %1174 = vmatmul.mubr.f32.gmra.mrb[0].mxu0 %v1104
    %v1175 = vpop.f32.mrb[0].mxu0
    %v1176 = vadd.f32 0.0, %v1175
    %v1177 = vpop.f32.mrb[0].mxu0
    %v1178 = vadd.f32 0.0, %v1177
    %1179 = vdwg.mxu0
    %1180 = vmatprep.subr.mxu0 0.0
    %1181 = vmatpush1.msra.mxu0 %v61
    %1182 = vmatprep.subr.mxu0 0.0
    %1183 = vmatpush1.msra.mxu0 %v64
    %1184 = vmatprep.subr.mxu0 0.0
    %1185 = vmatpush1.msra.mxu0 %v67
    %1186 = vmatprep.subr.mxu0 0.0
    %1187 = vmatpush1.msra.mxu0 %v70
    %1188 = vmatprep.subr.mxu0 0.0
    %1189 = vmatpush1.msra.mxu0 %v73
    %1190 = vmatprep.subr.mxu0 0.0
    %1191 = vmatpush1.msra.mxu0 %v76
    %1192 = vmatprep.subr.mxu0 0.0
    %1193 = vmatpush1.msra.mxu0 %v79
    %1194 = vmatprep.subr.mxu0 0.0
    %1195 = vmatpush1.msra.mxu0 %v82
    %1196 = vmatprep.subr.mxu0 0.0
    %1197 = vmatpush1.msra.mxu0 %v85
    %1198 = vmatprep.subr.mxu0 0.0
    %1199 = vmatpush1.msra.mxu0 %v88
    %1200 = vmatprep.subr.mxu0 0.0
    %1201 = vmatpush1.msra.mxu0 %v91
    %1202 = vmatprep.subr.mxu0 0.0
    %1203 = vmatpush1.msra.mxu0 %v94
    %1204 = vmatprep.subr.mxu0 0.0
    %1205 = vmatpush1.msra.mxu0 %v97
    %1206 = vmatprep.subr.mxu0 0.0
    %1207 = vmatpush1.msra.mxu0 %v100
    %1208 = vmatprep.subr.mxu0 0.0
    %1209 = vmatpush1.msra.mxu0 %v103
    %1210 = vmatprep.subr.mxu0 0.0
    %1211 = vmatpush1.msra.mxu0 %v106
    %1212 = vmatprep.subr.mxu0 0.0
    %1213 = vmatpush1.msra.mxu0 0.0
    %1214 = vmatprep.subr.mxu0 0.0
    %1215 = vmatpush1.msra.mxu0 0.0
    %1216 = vmatprep.subr.mxu0 0.0
    %1217 = vmatpush1.msra.mxu0 0.0
    %1218 = vmatprep.subr.mxu0 0.0
    %1219 = vmatpush1.msra.mxu0 0.0
    %1220 = vmatprep.subr.mxu0 0.0
    %1221 = vmatpush1.msra.mxu0 0.0
    %1222 = vmatprep.subr.mxu0 0.0
    %1223 = vmatpush1.msra.mxu0 0.0
    %1224 = vmatprep.subr.mxu0 0.0
    %1225 = vmatpush1.msra.mxu0 0.0
    %1226 = vmatprep.subr.mxu0 0.0
    %1227 = vmatpush1.msra.mxu0 0.0
    %1228 = vmatprep.subr.mxu0 0.0
    %1229 = vmatpush1.msra.mxu0 0.0
    %1230 = vmatprep.subr.mxu0 0.0
    %1231 = vmatpush1.msra.mxu0 0.0
    %1232 = vmatprep.subr.mxu0 0.0
    %1233 = vmatpush1.msra.mxu0 0.0
    %1234 = vmatprep.subr.mxu0 0.0
    %1235 = vmatpush1.msra.mxu0 0.0
    %1236 = vmatprep.subr.mxu0 0.0
    %1237 = vmatpush1.msra.mxu0 0.0
    %1238 = vmatprep.subr.mxu0 0.0
    %1239 = vmatpush1.msra.mxu0 0.0
    %1240 = vmatprep.subr.mxu0 0.0
    %1241 = vmatpush1.msra.mxu0 0.0
    %1242 = vmatprep.subr.mxu0 0.0
    %1243 = vmatpush1.msra.mxu0 0.0
    %1244 = vmatprep.mubr.f32.mxu0 0.0
    %1245 = vmatmul.mubr.f32.gmra.mrb[0].mxu0 %v1104
    %v1246 = vpop.f32.mrb[0].mxu0
    %v1247 = vadd.f32 0.0, %v1246
    %v1248 = vpop.f32.mrb[0].mxu0
    %1249 = vdwg.mxu0
    %v1250 = vadd.f32 %v1106, %v1176
    %v1251 = vxor.u32 %v1250, 2147483648
    %v1252 = vmul.f32 %v1251, 1.442695
    %v1253 = vpow.pop %v1252
    %v1254 = vadd.f32 %v1253, 1.0
    %v1255 = vrcp.pop %v1254
    %v1256 = vmul.f32 1.0, %v1255
    %v1257 = vadd.f32 %v1107, %v1178
    %v1258 = vxor.u32 %v1257, 2147483648
    %v1259 = vmul.f32 %v1258, 1.442695
    %v1260 = vpow.pop %v1259
    %v1261 = vadd.f32 %v1260, 1.0
    %v1262 = vrcp.pop %v1261
    %v1263 = vmul.f32 1.0, %v1262
    %v1264 = vadd.f32 %v1247, %v53
    %v1265 = vmul.f32 %v1256, %v1264
    %v1266 = vadd.f32 %v1108, %v1265
    %v1267 = vtanh.pop %v1266
    %v1268 = vsub.f32 1.0, %v1263
    %v1269 = vmul.f32 %v1268, %v1267
    %v1270 = vmul.f32 %v1263, %v1104
    %v1271 = vadd.f32 %v1269, %v1270
    %s1272 = scalar_lea.vmem [#allocation2], 168
    %v1273 = vld [vmem:[%s1272] sm:$0xff]
    %v1274 = vld [vmem:[%s1272 + $0x8] sm:$0xff]
    %v1275 = vld [vmem:[%s1272 + $0x10] sm:$0xff]
    %1276 = vmatprep.subr.mxu0 %v60
    %1277 = vmatpush1.msra.mxu0 %v59
    %1278 = vmatprep.subr.mxu0 %v63
    %1279 = vmatpush1.msra.mxu0 %v62
    %1280 = vmatprep.subr.mxu0 %v66
    %1281 = vmatpush1.msra.mxu0 %v65
    %1282 = vmatprep.subr.mxu0 %v69
    %1283 = vmatpush1.msra.mxu0 %v68
    %1284 = vmatprep.subr.mxu0 %v72
    %1285 = vmatpush1.msra.mxu0 %v71
    %1286 = vmatprep.subr.mxu0 %v75
    %1287 = vmatpush1.msra.mxu0 %v74
    %1288 = vmatprep.subr.mxu0 %v78
    %1289 = vmatpush1.msra.mxu0 %v77
    %1290 = vmatprep.subr.mxu0 %v81
    %1291 = vmatpush1.msra.mxu0 %v80
    %1292 = vmatprep.subr.mxu0 %v84
    %1293 = vmatpush1.msra.mxu0 %v83
    %1294 = vmatprep.subr.mxu0 %v87
    %1295 = vmatpush1.msra.mxu0 %v86
    %1296 = vmatprep.subr.mxu0 %v90
    %1297 = vmatpush1.msra.mxu0 %v89
    %1298 = vmatprep.subr.mxu0 %v93
    %1299 = vmatpush1.msra.mxu0 %v92
    %1300 = vmatprep.subr.mxu0 %v96
    %1301 = vmatpush1.msra.mxu0 %v95
    %1302 = vmatprep.subr.mxu0 %v99
    %1303 = vmatpush1.msra.mxu0 %v98
    %1304 = vmatprep.subr.mxu0 %v102
    %1305 = vmatpush1.msra.mxu0 %v101
    %1306 = vmatprep.subr.mxu0 %v105
    %1307 = vmatpush1.msra.mxu0 %v104
    %1308 = vmatprep.subr.mxu0 0.0
    %1309 = vmatpush1.msra.mxu0 0.0
    %1310 = vmatprep.subr.mxu0 0.0
    %1311 = vmatpush1.msra.mxu0 0.0
    %1312 = vmatprep.subr.mxu0 0.0
    %1313 = vmatpush1.msra.mxu0 0.0
    %1314 = vmatprep.subr.mxu0 0.0
    %1315 = vmatpush1.msra.mxu0 0.0
    %1316 = vmatprep.subr.mxu0 0.0
    %1317 = vmatpush1.msra.mxu0 0.0
    %1318 = vmatprep.subr.mxu0 0.0
    %1319 = vmatpush1.msra.mxu0 0.0
    %1320 = vmatprep.subr.mxu0 0.0
    %1321 = vmatpush1.msra.mxu0 0.0
    %1322 = vmatprep.subr.mxu0 0.0
    %1323 = vmatpush1.msra.mxu0 0.0
    %1324 = vmatprep.subr.mxu0 0.0
    %1325 = vmatpush1.msra.mxu0 0.0
    %1326 = vmatprep.subr.mxu0 0.0
    %1327 = vmatpush1.msra.mxu0 0.0
    %1328 = vmatprep.subr.mxu0 0.0
    %1329 = vmatpush1.msra.mxu0 0.0
    %1330 = vmatprep.subr.mxu0 0.0
    %1331 = vmatpush1.msra.mxu0 0.0
    %1332 = vmatprep.subr.mxu0 0.0
    %1333 = vmatpush1.msra.mxu0 0.0
    %1334 = vmatprep.subr.mxu0 0.0
    %1335 = vmatpush1.msra.mxu0 0.0
    %1336 = vmatprep.subr.mxu0 0.0
    %1337 = vmatpush1.msra.mxu0 0.0
    %1338 = vmatprep.subr.mxu0 0.0
    %1339 = vmatpush1.msra.mxu0 0.0
    %1340 = vmatprep.mubr.f32.mxu0 0.0
    %1341 = vmatmul.mubr.f32.gmra.mrb[0].mxu0 %v1271
    %v1342 = vpop.f32.mrb[0].mxu0
    %v1343 = vadd.f32 0.0, %v1342
    %v1344 = vpop.f32.mrb[0].mxu0
    %v1345 = vadd.f32 0.0, %v1344
    %1346 = vdwg.mxu0
    %1347 = vmatprep.subr.mxu0 0.0
    %1348 = vmatpush1.msra.mxu0 %v61
    %1349 = vmatprep.subr.mxu0 0.0
    %1350 = vmatpush1.msra.mxu0 %v64
    %1351 = vmatprep.subr.mxu0 0.0
    %1352 = vmatpush1.msra.mxu0 %v67
    %1353 = vmatprep.subr.mxu0 0.0
    %1354 = vmatpush1.msra.mxu0 %v70
    %1355 = vmatprep.subr.mxu0 0.0
    %1356 = vmatpush1.msra.mxu0 %v73
    %1357 = vmatprep.subr.mxu0 0.0
    %1358 = vmatpush1.msra.mxu0 %v76
    %1359 = vmatprep.subr.mxu0 0.0
    %1360 = vmatpush1.msra.mxu0 %v79
    %1361 = vmatprep.subr.mxu0 0.0
    %1362 = vmatpush1.msra.mxu0 %v82
    %1363 = vmatprep.subr.mxu0 0.0
    %1364 = vmatpush1.msra.mxu0 %v85
    %1365 = vmatprep.subr.mxu0 0.0
    %1366 = vmatpush1.msra.mxu0 %v88
    %1367 = vmatprep.subr.mxu0 0.0
    %1368 = vmatpush1.msra.mxu0 %v91
    %1369 = vmatprep.subr.mxu0 0.0
    %1370 = vmatpush1.msra.mxu0 %v94
    %1371 = vmatprep.subr.mxu0 0.0
    %1372 = vmatpush1.msra.mxu0 %v97
    %1373 = vmatprep.subr.mxu0 0.0
    %1374 = vmatpush1.msra.mxu0 %v100
    %1375 = vmatprep.subr.mxu0 0.0
    %1376 = vmatpush1.msra.mxu0 %v103
    %1377 = vmatprep.subr.mxu0 0.0
    %1378 = vmatpush1.msra.mxu0 %v106
    %1379 = vmatprep.subr.mxu0 0.0
    %1380 = vmatpush1.msra.mxu0 0.0
    %1381 = vmatprep.subr.mxu0 0.0
    %1382 = vmatpush1.msra.mxu0 0.0
    %1383 = vmatprep.subr.mxu0 0.0
    %1384 = vmatpush1.msra.mxu0 0.0
    %1385 = vmatprep.subr.mxu0 0.0
    %1386 = vmatpush1.msra.mxu0 0.0
    %1387 = vmatprep.subr.mxu0 0.0
    %1388 = vmatpush1.msra.mxu0 0.0
    %1389 = vmatprep.subr.mxu0 0.0
    %1390 = vmatpush1.msra.mxu0 0.0
    %1391 = vmatprep.subr.mxu0 0.0
    %1392 = vmatpush1.msra.mxu0 0.0
    %1393 = vmatprep.subr.mxu0 0.0
    %1394 = vmatpush1.msra.mxu0 0.0
    %1395 = vmatprep.subr.mxu0 0.0
    %1396 = vmatpush1.msra.mxu0 0.0
    %1397 = vmatprep.subr.mxu0 0.0
    %1398 = vmatpush1.msra.mxu0 0.0
    %1399 = vmatprep.subr.mxu0 0.0
    %1400 = vmatpush1.msra.mxu0 0.0
    %1401 = vmatprep.subr.mxu0 0.0
    %1402 = vmatpush1.msra.mxu0 0.0
    %1403 = vmatprep.subr.mxu0 0.0
    %1404 = vmatpush1.msra.mxu0 0.0
    %1405 = vmatprep.subr.mxu0 0.0
    %1406 = vmatpush1.msra.mxu0 0.0
    %1407 = vmatprep.subr.mxu0 0.0
    %1408 = vmatpush1.msra.mxu0 0.0
    %1409 = vmatprep.subr.mxu0 0.0
    %1410 = vmatpush1.msra.mxu0 0.0
    %1411 = vmatprep.mubr.f32.mxu0 0.0
    %1412 = vmatmul.mubr.f32.gmra.mrb[0].mxu0 %v1271
    %v1413 = vpop.f32.mrb[0].mxu0
    %v1414 = vadd.f32 0.0, %v1413
    %v1415 = vpop.f32.mrb[0].mxu0
    %1416 = vdwg.mxu0
    %v1417 = vadd.f32 %v1273, %v1343
    %v1418 = vxor.u32 %v1417, 2147483648
    %v1419 = vmul.f32 %v1418, 1.442695
    %v1420 = vpow.pop %v1419
    %v1421 = vadd.f32 %v1420, 1.0
    %v1422 = vrcp.pop %v1421
    %v1423 = vmul.f32 1.0, %v1422
    %v1424 = vadd.f32 %v1274, %v1345
    %v1425 = vxor.u32 %v1424, 2147483648
    %v1426 = vmul.f32 %v1425, 1.442695
    %v1427 = vpow.pop %v1426
    %v1428 = vadd.f32 %v1427, 1.0
    %v1429 = vrcp.pop %v1428
    %v1430 = vmul.f32 1.0, %v1429
    %v1431 = vadd.f32 %v1414, %v53
    %v1432 = vmul.f32 %v1423, %v1431
    %v1433 = vadd.f32 %v1275, %v1432
    %v1434 = vtanh.pop %v1433
    %v1435 = vsub.f32 1.0, %v1430
    %v1436 = vmul.f32 %v1435, %v1434
    %v1437 = vmul.f32 %v1430, %v1271
    %v1438 = vadd.f32 %v1436, %v1437
    %1439 = vst [vmem:[#allocation7] sm:$0xff] %v1438
    // Predicated region
    $region26: #{tpu_custom_call.1} parent=1 // pred_check
      _
    $region27: #{tpu_custom_call.1} parent=1 // pred_check_branch
      %1441 = sbr.rel (0) target = $region29
    $region28: #{tpu_custom_call.1} parent=1 // pred_region
      %s1443 = ssub.s32 128, 128
      %1444 = vsyncadd [#allocation4], %s1443
      %s1446 = sshll.u32 [#allocation7], 4
      %s1447 = int_to_ptr.vmem [resolvable:$true] %s1446
      %1449 = dma.vmem_to_hbm [thread:$0]  %s1447, 128, %s3, [#allocation4]
    $region29: #{tpu_custom_call.1} parent=1 // pred_fallthru
      _
    // Predicated region
    $region30: #{tpu_custom_call.1} parent=1 // pred_check
      _
    $region31: #{tpu_custom_call.1} parent=1 // pred_check_branch
      %1451 = sbr.rel (0) target = $region33
    $region32: #{tpu_custom_call.1} parent=1 // pred_region
      %1452 = dma.done [#allocation4], 128
    $region33: #{tpu_custom_call.1} parent=1 // pred_fallthru
      _
    %1453 = vsyncpa [#allocation3], 1
    %1454 = vsyncpa [#allocation6], 1
    %1455 = vsyncpa [#allocation4], 1

</llo_original>
